<compile_context>
chip_gen: v7x
topology: tpu7x:2x2x1
jax: 0.10.0
libtpu: 0.0.40
codegen_flags: <defaults>
</compile_context>

<pallas_src>
import jax
import jax.numpy as jnp
from jax.experimental import pallas as pl
from jax.experimental.pallas import tpu as pltpu

H = 32          # LSTM hidden size / process_speeds output size
D_SHORT = 4     # synthetic per-step short-speed feature dim
D_LONG = 4      # synthetic per-step long-speed feature dim
B_TILE = 8      # batch tile (multiple of 8 -> sublane constraint when tiling)
# TODO(synk): ShortSpeed / LongSpeed sub-modules are not defined in the provided
# source; they are modeled as Linear(d->32)+tanh producing the 32+32=64
# features that process_speeds (Linear(64,32)) expects.


def _speed_lstm_kernel(x_ref, mask_ref,
                       wblk_ref, bblk_ref, wp_ref, bp_ref,
                       wih_ref, blstm_ref, whh_ref,
                       out_ref, gx_scr):
    # x_ref: (T, Bt, Din), mask_ref: (T, Bt, 1), out_ref: (T, Bt, H)
    # gx_scr: (T, Bt, 4H) lane-dense precomputed "input half" of the gates.
    T, Bt, Din = x_ref.shape

    # ---- time-parallel pre-pass: every matmul that does NOT sit on the serial
    #      t->t+1 dependence is done once, here. ----
    x = x_ref[...].reshape(T * Bt, Din)
    # fused ShortSpeed | LongSpeed (block-diagonal weight) + tanh -> (T*Bt, 2H)
    sl = jnp.tanh(
        jnp.dot(x, wblk_ref[...], preferred_element_type=jnp.float32)
        + bblk_ref[...])
    # process_speeds + tanh -> (T*Bt, H)
    proj = jnp.tanh(
        jnp.dot(sl, wp_ref[...], preferred_element_type=jnp.float32)
        + bp_ref[...])
    # input half of the LSTM gates + combined bias -> (T*Bt, 4H), lane-dense
    gx = (jnp.dot(proj, wih_ref[...], preferred_element_type=jnp.float32)
          + blstm_ref[...])
    gx_scr[...] = gx.reshape(T, Bt, 4 * H)

    whh = whh_ref[...]        # (H, 4H); may be bf16 (MXU fast path on v6e/v7x)

    # ---- serial recurrence: only h @ W_hh + elementwise gate math per step ----
    # PyTorch gate order: i, f, g, o.
    def step(t, carry):
        h, c = carry
        gates = (jnp.dot(h.astype(whh.dtype), whh,
                         preferred_element_type=jnp.float32)
                 + gx_scr[t])
        i = jax.nn.sigmoid(gates[:, 0 * H:1 * H])
        f = jax.nn.sigmoid(gates[:, 1 * H:2 * H])
        g = jnp.tanh(gates[:, 2 * H:3 * H])
        o = jax.nn.sigmoid(gates[:, 3 * H:4 * H])
        c_new = f * c + i * g
        h_new = o * jnp.tanh(c_new)
        # pack_padded / pad_packed semantics: zero outputs past each seq length,
        # applied in-loop so no extra full-output VMEM pass is needed.
        out_ref[t] = h_new * mask_ref[t]
        return h_new, c_new

    h0 = jnp.zeros((Bt, H), jnp.float32)
    c0 = jnp.zeros((Bt, H), jnp.float32)
    jax.lax.fori_loop(0, T, step, (h0, c0), unroll=True)


def speed_lstm_forward(shortspeeds, longspeeds, lens, params,
                       recurrent_dtype=jnp.bfloat16):
    """shortspeeds/longspeeds: (B, T, D) batch-first; lens: python list of ints.

    recurrent_dtype: dtype fed to the MXU for the h @ W_hh recurrent matmul
    (bf16 recommended on v6e/v7x; accumulation & gate math stay f32).
    """
    B, T, Ds = shortspeeds.shape
    Dl = longspeeds.shape[-1]
    Din = Ds + Dl
    lens_arr = jnp.asarray(lens, jnp.int32)

    n_tiles = pl.cdiv(B, B_TILE)
    B_pad = n_tiles * B_TILE

    # Fuse ShortSpeed/LongSpeed into a single block-diagonal linear so the
    # kernel does one matmul and no lane concat.
    w_blk = jnp.zeros((Din, 2 * H), jnp.float32)
    w_blk = w_blk.at[:Ds, :H].set(params['ws'])
    w_blk = w_blk.at[Ds:, H:].set(params['wl'])
    b_blk = jnp.concatenate([params['bs'], params['bl']], axis=-1)     # (1, 2H)

    # time-major views for the kernel, padded to a multiple of B_TILE
    x_tm = jnp.transpose(jnp.concatenate([shortspeeds, longspeeds], axis=-1),
                         (1, 0, 2))                                    # (T, B, Din)
    mask_tm = (jnp.arange(T)[:, None] < lens_arr[None, :]).astype(jnp.float32)
    if B_pad != B:
        x_tm = jnp.pad(x_tm, ((0, 0), (0, B_pad - B), (0, 0)))
        mask_tm = jnp.pad(mask_tm, ((0, 0), (0, B_pad - B)))
    mask_tm = mask_tm[:, :, None]                                      # (T, B_pad, 1)

    whh = params['whh_t'].astype(recurrent_dtype)

    batch_spec = lambda shape: pl.BlockSpec(shape, lambda i: (0, i, 0))
    const2d = lambda shape: pl.BlockSpec(shape, lambda i: (0, 0))

    out_tm = pl.pallas_call(
        _speed_lstm_kernel,
        out_shape=jax.ShapeDtypeStruct((T, B_pad, H), jnp.float32),
        grid=(n_tiles,),
        in_specs=[
            batch_spec((T, B_TILE, Din)),
            batch_spec((T, B_TILE, 1)),
            const2d(w_blk.shape),
            const2d(b_blk.shape),
            const2d(params['wp'].shape),
            const2d(params['bp'].shape),
            const2d(params['wih_t'].shape),
            const2d(params['b_lstm'].shape),
            const2d(whh.shape),
        ],
        out_specs=batch_spec((T, B_TILE, H)),
        scratch_shapes=[pltpu.VMEM((T, B_TILE, 4 * H), jnp.float32)],
        compiler_params=pltpu.CompilerParams(
            dimension_semantics=("parallel",),
            vmem_limit_bytes=16 * 1024 * 1024),
    )(x_tm, mask_tm, w_blk, b_blk, params['wp'], params['bp'],
      params['wih_t'], params['b_lstm'], whh)

    out = jnp.transpose(out_tm, (1, 0, 2))[:B]                         # (B, T, H)
    # pad_packed_sequence pads to max(lens); lens is a python list (not traced).
    max_len = int(max(lens))
    return out[:, :max_len, :]


def _reference(shortspeeds, longspeeds, lens, p):
    """Pure-JAX reference (mirrors the PyTorch forward) for validation."""
    short = jnp.tanh(shortspeeds @ p['ws'] + p['bs'][0])
    long_ = jnp.tanh(longspeeds @ p['wl'] + p['bl'][0])
    x = jnp.tanh(jnp.concatenate([short, long_], axis=-1) @ p['wp'] + p['bp'][0])
    B, T, _ = x.shape

    def step(carry, x_t):
        h, c = carry
        gates = x_t @ p['wih_t'] + h @ p['whh_t'] + p['b_lstm'][0]
        i, f, g, o = jnp.split(gates, 4, axis=-1)
        i, f, g, o = jax.nn.sigmoid(i), jax.nn.sigmoid(f), jnp.tanh(g), jax.nn.sigmoid(o)
        c = f * c + i * g
        h = o * jnp.tanh(c)
        return (h, c), h

    init = (jnp.zeros((B, H), jnp.float32), jnp.zeros((B, H), jnp.float32))
    _, hs = jax.lax.scan(step, init, jnp.transpose(x, (1, 0, 2)))
    hs = jnp.transpose(hs, (1, 0, 2))
    mask = (jnp.arange(T)[None, :] < jnp.asarray(lens)[:, None]).astype(hs.dtype)
    hs = hs * mask[:, :, None]
    return hs[:, :int(max(lens)), :]


def _init_params(key):
    ks = jax.random.split(key, 9)
    u = lambda k, shape, s: jax.random.uniform(k, shape, jnp.float32, -s, s)
    inv_sqrt_h = 1.0 / (H ** 0.5)
    return {
        'ws': u(ks[0], (D_SHORT, H), 0.5),
        'bs': u(ks[1], (1, H), 0.1),
        'wl': u(ks[2], (D_LONG, H), 0.5),
        'bl': u(ks[3], (1, H), 0.1),
        'wp': u(ks[4], (2 * H, H), 0.125),          # process_speeds: Linear(64, 32)
        'bp': u(ks[5], (1, H), 0.125),
        'wih_t': u(ks[6], (H, 4 * H), inv_sqrt_h),  # W_ih^T  (input->gates)
        'whh_t': u(ks[7], (H, 4 * H), inv_sqrt_h),  # W_hh^T  (hidden->gates)
        'b_lstm': u(ks[8], (1, 4 * H), inv_sqrt_h), # b_ih + b_hh combined
    }


if __name__ == "__main__":
    key = jax.random.PRNGKey(0)
    k_p, k_s, k_l, k_s2, k_l2 = jax.random.split(key, 5)
    params = _init_params(k_p)

    # --- test 1: B=2, T=8 (single batch tile after padding) ---
    B, T = 2, 8
    shortspeeds = jax.random.normal(k_s, (B, T, D_SHORT), jnp.float32)
    longspeeds = jax.random.normal(k_l, (B, T, D_LONG), jnp.float32)
    lens = [8, 5]  # sorted descending, as pack_padded_sequence requires
    ref = jax.block_until_ready(_reference(shortspeeds, longspeeds, lens, params))

    # strict correctness check with an all-f32 recurrent matmul
    out_f32 = jax.block_until_ready(
        speed_lstm_forward(shortspeeds, longspeeds, lens, params,
                           recurrent_dtype=jnp.float32))
    assert out_f32.shape == (B, max(lens), H), out_f32.shape
    assert jnp.allclose(out_f32, ref, atol=1e-4, rtol=1e-4), \
        float(jnp.max(jnp.abs(out_f32 - ref)))

    # bf16 recurrent weight (v6e/v7x MXU fast path); gate math stays f32, so
    # only bf16 rounding of h/W_hh differs from the f32 reference -> loose tol.
    out_bf16 = jax.block_until_ready(
        speed_lstm_forward(shortspeeds, longspeeds, lens, params,
                           recurrent_dtype=jnp.bfloat16))
    assert jnp.allclose(out_bf16, ref, atol=5e-2, rtol=5e-2), \
        float(jnp.max(jnp.abs(out_bf16 - ref)))

    # --- test 2: multi-tile grid + batch padding (B=10 -> B_pad=16, 2 tiles),
    #             max(lens) < T exercises pad_packed truncation ---
    B2, T2 = 10, 12
    ss2 = jax.random.normal(k_s2, (B2, T2, D_SHORT), jnp.float32)
    ls2 = jax.random.normal(k_l2, (B2, T2, D_LONG), jnp.float32)
    lens2 = [10, 9, 8, 7, 6, 5, 4, 3, 2, 1]
    ref2 = jax.block_until_ready(_reference(ss2, ls2, lens2, params))
    out2 = jax.block_until_ready(
        speed_lstm_forward(ss2, ls2, lens2, params, recurrent_dtype=jnp.float32))
    assert out2.shape == (B2, max(lens2), H), out2.shape
    assert jnp.allclose(out2, ref2, atol=1e-4, rtol=1e-4), \
        float(jnp.max(jnp.abs(out2 - ref2)))

    print("KERNEL_OK")
</pallas_src>

<mosaic_0001>
module attributes {stable_mosaic.version = 11 : i64} {
  func.func @_speed_lstm_kernel(%arg0: i32, %arg1: memref<8x8x8xf32, #tpu.memory_space<vmem>>, %arg2: memref<8x8x1xf32, #tpu.memory_space<vmem>>, %arg3: memref<8x64xf32, #tpu.memory_space<vmem>>, %arg4: memref<1x64xf32, #tpu.memory_space<vmem>>, %arg5: memref<64x32xf32, #tpu.memory_space<vmem>>, %arg6: memref<1x32xf32, #tpu.memory_space<vmem>>, %arg7: memref<32x128xf32, #tpu.memory_space<vmem>>, %arg8: memref<1x128xf32, #tpu.memory_space<vmem>>, %arg9: memref<32x128xf32, #tpu.memory_space<vmem>>, %arg10: memref<8x8x32xf32, #tpu.memory_space<vmem>>, %arg11: memref<8x8x128xf32, #tpu.memory_space<vmem>>) attributes {dimension_semantics = [#tpu.dimension_semantics<parallel>], iteration_bounds = array<i64: 1>, scalar_prefetch = 0 : i64, scratch_operands = 1 : i64, tpu.core_type = #tpu.core_type<tc>, window_params = [{transform_indices = @transform_0, window_bounds = array<i64: 8, 8, 8>}, {transform_indices = @transform_1, window_bounds = array<i64: 8, 8, 1>}, {pipeline_mode = #tpu.pipeline_mode<synchronous>, transform_indices = @transform_2, window_bounds = array<i64: 8, 64>}, {pipeline_mode = #tpu.pipeline_mode<synchronous>, transform_indices = @transform_3, window_bounds = array<i64: 1, 64>}, {pipeline_mode = #tpu.pipeline_mode<synchronous>, transform_indices = @transform_4, window_bounds = array<i64: 64, 32>}, {pipeline_mode = #tpu.pipeline_mode<synchronous>, transform_indices = @transform_5, window_bounds = array<i64: 1, 32>}, {pipeline_mode = #tpu.pipeline_mode<synchronous>, transform_indices = @transform_6, window_bounds = array<i64: 32, 128>}, {pipeline_mode = #tpu.pipeline_mode<synchronous>, transform_indices = @transform_7, window_bounds = array<i64: 1, 128>}, {pipeline_mode = #tpu.pipeline_mode<synchronous>, transform_indices = @transform_8, window_bounds = array<i64: 32, 128>}, {transform_indices = @transform_9, window_bounds = array<i64: 8, 8, 32>}]} {
    %c0 = arith.constant 0 : index
    %c0_0 = arith.constant 0 : index
    %c0_1 = arith.constant 0 : index
    %0 = vector.load %arg1[%c0, %c0_0, %c0_1] : memref<8x8x8xf32, #tpu.memory_space<vmem>>, vector<8x8x8xf32>
    %1 = vector.shape_cast %0 : vector<8x8x8xf32> to vector<64x8xf32>
    %c0_2 = arith.constant 0 : index
    %c0_3 = arith.constant 0 : index
    %2 = vector.load %arg3[%c0_2, %c0_3] : memref<8x64xf32, #tpu.memory_space<vmem>>, vector<8x64xf32>
    %cst = arith.constant dense<0.000000e+00> : vector<64x64xf32>
    %3 = tpu.matmul %1, %2, %cst {dimension_numbers = #tpu.dot_dimension_numbers<[1], [0], [0], [1], [0, 0, 1, 1], [], []>} : vector<64x8xf32>, vector<8x64xf32>, vector<64x64xf32> -> vector<64x64xf32>
    %c0_4 = arith.constant 0 : index
    %c0_5 = arith.constant 0 : index
    %4 = vector.load %arg4[%c0_4, %c0_5] : memref<1x64xf32, #tpu.memory_space<vmem>>, vector<1x64xf32>
    %5 = vector.broadcast %4 : vector<1x64xf32> to vector<64x64xf32>
    %6 = arith.addf %3, %5 : vector<64x64xf32>
    %7 = math.tanh %6 : vector<64x64xf32>
    %c0_6 = arith.constant 0 : index
    %c0_7 = arith.constant 0 : index
    %8 = vector.load %arg5[%c0_6, %c0_7] : memref<64x32xf32, #tpu.memory_space<vmem>>, vector<64x32xf32>
    %cst_8 = arith.constant dense<0.000000e+00> : vector<64x32xf32>
    %9 = tpu.matmul %7, %8, %cst_8 {dimension_numbers = #tpu.dot_dimension_numbers<[1], [0], [0], [1], [0, 0, 1, 1], [], []>} : vector<64x64xf32>, vector<64x32xf32>, vector<64x32xf32> -> vector<64x32xf32>
    %c0_9 = arith.constant 0 : index
    %c0_10 = arith.constant 0 : index
    %10 = vector.load %arg6[%c0_9, %c0_10] : memref<1x32xf32, #tpu.memory_space<vmem>>, vector<1x32xf32>
    %11 = vector.broadcast %10 : vector<1x32xf32> to vector<64x32xf32>
    %12 = arith.addf %9, %11 : vector<64x32xf32>
    %13 = math.tanh %12 : vector<64x32xf32>
    %c0_11 = arith.constant 0 : index
    %c0_12 = arith.constant 0 : index
    %14 = vector.load %arg7[%c0_11, %c0_12] : memref<32x128xf32, #tpu.memory_space<vmem>>, vector<32x128xf32>
    %cst_13 = arith.constant dense<0.000000e+00> : vector<64x128xf32>
    %15 = tpu.matmul %13, %14, %cst_13 {dimension_numbers = #tpu.dot_dimension_numbers<[1], [0], [0], [1], [0, 0, 1, 1], [], []>} : vector<64x32xf32>, vector<32x128xf32>, vector<64x128xf32> -> vector<64x128xf32>
    %c0_14 = arith.constant 0 : index
    %c0_15 = arith.constant 0 : index
    %16 = vector.load %arg8[%c0_14, %c0_15] : memref<1x128xf32, #tpu.memory_space<vmem>>, vector<1x128xf32>
    %17 = vector.broadcast %16 : vector<1x128xf32> to vector<64x128xf32>
    %18 = arith.addf %15, %17 : vector<64x128xf32>
    %19 = vector.shape_cast %18 : vector<64x128xf32> to vector<8x8x128xf32>
    %c0_16 = arith.constant 0 : index
    %c0_17 = arith.constant 0 : index
    %c0_18 = arith.constant 0 : index
    %20 = vector.load %arg11[%c0_16, %c0_17, %c0_18] : memref<8x8x128xf32, #tpu.memory_space<vmem>>, vector<8x8x128xf32>
    tpu.vector_store %arg11[%c0_16, %c0_17, %c0_18], %19 {strides = array<i32>} : memref<8x8x128xf32, #tpu.memory_space<vmem>>, vector<8x8x128xf32>,
    %c0_19 = arith.constant 0 : index
    %c0_20 = arith.constant 0 : index
    %21 = vector.load %arg9[%c0_19, %c0_20] : memref<32x128xf32, #tpu.memory_space<vmem>>, vector<32x128xf32>
    %cst_21 = arith.constant 0.000000e+00 : f32
    %22 = vector.broadcast %cst_21 : f32 to vector<8x32xf32>
    %cst_22 = arith.constant 0.000000e+00 : f32
    %23 = vector.broadcast %cst_22 : f32 to vector<8x32xf32>
    %c0_i32 = arith.constant 0 : i32
    %cst_23 = arith.constant dense<0.000000e+00> : vector<8x128xf32>
    %24 = tpu.matmul %22, %21, %cst_23 {dimension_numbers = #tpu.dot_dimension_numbers<[1], [0], [0], [1], [0, 0, 1, 1], [], []>} : vector<8x32xf32>, vector<32x128xf32>, vector<8x128xf32> -> vector<8x128xf32>
    %25 = arith.index_cast %c0_i32 : i32 to index
    %c0_24 = arith.constant 0 : index
    %c0_25 = arith.constant 0 : index
    %26 = vector.load %arg11[%25, %c0_24, %c0_25] : memref<8x8x128xf32, #tpu.memory_space<vmem>>, vector<1x8x128xf32>
    %27 = vector.shape_cast %26 : vector<1x8x128xf32> to vector<8x128xf32>
    %28 = arith.addf %24, %27 : vector<8x128xf32>
    %29 = vector.extract_strided_slice %28 {offsets = [0, 0], sizes = [8, 32], strides = [1, 1]} : vector<8x128xf32> to vector<8x32xf32>
    %30 = arith.negf %29 : vector<8x32xf32>
    %31 = math.exp %30 : vector<8x32xf32>
    %cst_26 = arith.constant 1.000000e+00 : f32
    %32 = vector.broadcast %cst_26 : f32 to vector<8x32xf32>
    %33 = arith.addf %32, %31 : vector<8x32xf32>
    %34 = arith.divf %32, %33 : vector<8x32xf32>
    %35 = vector.extract_strided_slice %28 {offsets = [0, 32], sizes = [8, 32], strides = [1, 1]} : vector<8x128xf32> to vector<8x32xf32>
    %36 = arith.negf %35 : vector<8x32xf32>
    %37 = math.exp %36 : vector<8x32xf32>
    %cst_27 = arith.constant 1.000000e+00 : f32
    %38 = vector.broadcast %cst_27 : f32 to vector<8x32xf32>
    %39 = arith.addf %38, %37 : vector<8x32xf32>
    %40 = arith.divf %38, %39 : vector<8x32xf32>
    %41 = vector.extract_strided_slice %28 {offsets = [0, 64], sizes = [8, 32], strides = [1, 1]} : vector<8x128xf32> to vector<8x32xf32>
    %42 = math.tanh %41 : vector<8x32xf32>
    %43 = vector.extract_strided_slice %28 {offsets = [0, 96], sizes = [8, 32], strides = [1, 1]} : vector<8x128xf32> to vector<8x32xf32>
    %44 = arith.negf %43 : vector<8x32xf32>
    %45 = math.exp %44 : vector<8x32xf32>
    %cst_28 = arith.constant 1.000000e+00 : f32
    %46 = vector.broadcast %cst_28 : f32 to vector<8x32xf32>
    %47 = arith.addf %46, %45 : vector<8x32xf32>
    %48 = arith.divf %46, %47 : vector<8x32xf32>
    %49 = arith.mulf %40, %23 : vector<8x32xf32>
    %50 = arith.mulf %34, %42 : vector<8x32xf32>
    %51 = arith.addf %49, %50 : vector<8x32xf32>
    %52 = math.tanh %51 : vector<8x32xf32>
    %53 = arith.mulf %48, %52 : vector<8x32xf32>
    %54 = arith.index_cast %c0_i32 : i32 to index
    %c0_29 = arith.constant 0 : index
    %c0_30 = arith.constant 0 : index
    %55 = vector.load %arg2[%54, %c0_29, %c0_30] : memref<8x8x1xf32, #tpu.memory_space<vmem>>, vector<1x8x1xf32>
    %56 = vector.shape_cast %55 : vector<1x8x1xf32> to vector<8x1xf32>
    %57 = vector.broadcast %56 : vector<8x1xf32> to vector<8x32xf32>
    %58 = arith.mulf %53, %57 : vector<8x32xf32>
    %59 = arith.index_cast %c0_i32 : i32 to index
    %c0_31 = arith.constant 0 : index
    %c0_32 = arith.constant 0 : index
    %60 = vector.load %arg10[%59, %c0_31, %c0_32] : memref<8x8x32xf32, #tpu.memory_space<vmem>>, vector<1x8x32xf32>
    %61 = vector.shape_cast %60 : vector<1x8x32xf32> to vector<8x32xf32>
    %62 = vector.shape_cast %58 : vector<8x32xf32> to vector<1x8x32xf32>
    tpu.vector_store %arg10[%59, %c0_31, %c0_32], %62 {strides = array<i32>} : memref<8x8x32xf32, #tpu.memory_space<vmem>>, vector<1x8x32xf32>,
    %c1_i32 = arith.constant 1 : i32
    %cst_33 = arith.constant dense<0.000000e+00> : vector<8x128xf32>
    %63 = tpu.matmul %53, %21, %cst_33 {dimension_numbers = #tpu.dot_dimension_numbers<[1], [0], [0], [1], [0, 0, 1, 1], [], []>} : vector<8x32xf32>, vector<32x128xf32>, vector<8x128xf32> -> vector<8x128xf32>
    %64 = arith.index_cast %c1_i32 : i32 to index
    %c0_34 = arith.constant 0 : index
    %c0_35 = arith.constant 0 : index
    %65 = vector.load %arg11[%64, %c0_34, %c0_35] : memref<8x8x128xf32, #tpu.memory_space<vmem>>, vector<1x8x128xf32>
    %66 = vector.shape_cast %65 : vector<1x8x128xf32> to vector<8x128xf32>
    %67 = arith.addf %63, %66 : vector<8x128xf32>
    %68 = vector.extract_strided_slice %67 {offsets = [0, 0], sizes = [8, 32], strides = [1, 1]} : vector<8x128xf32> to vector<8x32xf32>
    %69 = arith.negf %68 : vector<8x32xf32>
    %70 = math.exp %69 : vector<8x32xf32>
    %cst_36 = arith.constant 1.000000e+00 : f32
    %71 = vector.broadcast %cst_36 : f32 to vector<8x32xf32>
    %72 = arith.addf %71, %70 : vector<8x32xf32>
    %73 = arith.divf %71, %72 : vector<8x32xf32>
    %74 = vector.extract_strided_slice %67 {offsets = [0, 32], sizes = [8, 32], strides = [1, 1]} : vector<8x128xf32> to vector<8x32xf32>
    %75 = arith.negf %74 : vector<8x32xf32>
    %76 = math.exp %75 : vector<8x32xf32>
    %cst_37 = arith.constant 1.000000e+00 : f32
    %77 = vector.broadcast %cst_37 : f32 to vector<8x32xf32>
    %78 = arith.addf %77, %76 : vector<8x32xf32>
    %79 = arith.divf %77, %78 : vector<8x32xf32>
    %80 = vector.extract_strided_slice %67 {offsets = [0, 64], sizes = [8, 32], strides = [1, 1]} : vector<8x128xf32> to vector<8x32xf32>
    %81 = math.tanh %80 : vector<8x32xf32>
    %82 = vector.extract_strided_slice %67 {offsets = [0, 96], sizes = [8, 32], strides = [1, 1]} : vector<8x128xf32> to vector<8x32xf32>
    %83 = arith.negf %82 : vector<8x32xf32>
    %84 = math.exp %83 : vector<8x32xf32>
    %cst_38 = arith.constant 1.000000e+00 : f32
    %85 = vector.broadcast %cst_38 : f32 to vector<8x32xf32>
    %86 = arith.addf %85, %84 : vector<8x32xf32>
    %87 = arith.divf %85, %86 : vector<8x32xf32>
    %88 = arith.mulf %79, %51 : vector<8x32xf32>
    %89 = arith.mulf %73, %81 : vector<8x32xf32>
    %90 = arith.addf %88, %89 : vector<8x32xf32>
    %91 = math.tanh %90 : vector<8x32xf32>
    %92 = arith.mulf %87, %91 : vector<8x32xf32>
    %93 = arith.index_cast %c1_i32 : i32 to index
    %c0_39 = arith.constant 0 : index
    %c0_40 = arith.constant 0 : index
    %94 = vector.load %arg2[%93, %c0_39, %c0_40] : memref<8x8x1xf32, #tpu.memory_space<vmem>>, vector<1x8x1xf32>
    %95 = vector.shape_cast %94 : vector<1x8x1xf32> to vector<8x1xf32>
    %96 = vector.broadcast %95 : vector<8x1xf32> to vector<8x32xf32>
    %97 = arith.mulf %92, %96 : vector<8x32xf32>
    %98 = arith.index_cast %c1_i32 : i32 to index
    %c0_41 = arith.constant 0 : index
    %c0_42 = arith.constant 0 : index
    %99 = vector.load %arg10[%98, %c0_41, %c0_42] : memref<8x8x32xf32, #tpu.memory_space<vmem>>, vector<1x8x32xf32>
    %100 = vector.shape_cast %99 : vector<1x8x32xf32> to vector<8x32xf32>
    %101 = vector.shape_cast %97 : vector<8x32xf32> to vector<1x8x32xf32>
    tpu.vector_store %arg10[%98, %c0_41, %c0_42], %101 {strides = array<i32>} : memref<8x8x32xf32, #tpu.memory_space<vmem>>, vector<1x8x32xf32>,
    %c2_i32 = arith.constant 2 : i32
    %cst_43 = arith.constant dense<0.000000e+00> : vector<8x128xf32>
    %102 = tpu.matmul %92, %21, %cst_43 {dimension_numbers = #tpu.dot_dimension_numbers<[1], [0], [0], [1], [0, 0, 1, 1], [], []>} : vector<8x32xf32>, vector<32x128xf32>, vector<8x128xf32> -> vector<8x128xf32>
    %103 = arith.index_cast %c2_i32 : i32 to index
    %c0_44 = arith.constant 0 : index
    %c0_45 = arith.constant 0 : index
    %104 = vector.load %arg11[%103, %c0_44, %c0_45] : memref<8x8x128xf32, #tpu.memory_space<vmem>>, vector<1x8x128xf32>
    %105 = vector.shape_cast %104 : vector<1x8x128xf32> to vector<8x128xf32>
    %106 = arith.addf %102, %105 : vector<8x128xf32>
    %107 = vector.extract_strided_slice %106 {offsets = [0, 0], sizes = [8, 32], strides = [1, 1]} : vector<8x128xf32> to vector<8x32xf32>
    %108 = arith.negf %107 : vector<8x32xf32>
    %109 = math.exp %108 : vector<8x32xf32>
    %cst_46 = arith.constant 1.000000e+00 : f32
    %110 = vector.broadcast %cst_46 : f32 to vector<8x32xf32>
    %111 = arith.addf %110, %109 : vector<8x32xf32>
    %112 = arith.divf %110, %111 : vector<8x32xf32>
    %113 = vector.extract_strided_slice %106 {offsets = [0, 32], sizes = [8, 32], strides = [1, 1]} : vector<8x128xf32> to vector<8x32xf32>
    %114 = arith.negf %113 : vector<8x32xf32>
    %115 = math.exp %114 : vector<8x32xf32>
    %cst_47 = arith.constant 1.000000e+00 : f32
    %116 = vector.broadcast %cst_47 : f32 to vector<8x32xf32>
    %117 = arith.addf %116, %115 : vector<8x32xf32>
    %118 = arith.divf %116, %117 : vector<8x32xf32>
    %119 = vector.extract_strided_slice %106 {offsets = [0, 64], sizes = [8, 32], strides = [1, 1]} : vector<8x128xf32> to vector<8x32xf32>
    %120 = math.tanh %119 : vector<8x32xf32>
    %121 = vector.extract_strided_slice %106 {offsets = [0, 96], sizes = [8, 32], strides = [1, 1]} : vector<8x128xf32> to vector<8x32xf32>
    %122 = arith.negf %121 : vector<8x32xf32>
    %123 = math.exp %122 : vector<8x32xf32>
    %cst_48 = arith.constant 1.000000e+00 : f32
    %124 = vector.broadcast %cst_48 : f32 to vector<8x32xf32>
    %125 = arith.addf %124, %123 : vector<8x32xf32>
    %126 = arith.divf %124, %125 : vector<8x32xf32>
    %127 = arith.mulf %118, %90 : vector<8x32xf32>
    %128 = arith.mulf %112, %120 : vector<8x32xf32>
    %129 = arith.addf %127, %128 : vector<8x32xf32>
    %130 = math.tanh %129 : vector<8x32xf32>
    %131 = arith.mulf %126, %130 : vector<8x32xf32>
    %132 = arith.index_cast %c2_i32 : i32 to index
    %c0_49 = arith.constant 0 : index
    %c0_50 = arith.constant 0 : index
    %133 = vector.load %arg2[%132, %c0_49, %c0_50] : memref<8x8x1xf32, #tpu.memory_space<vmem>>, vector<1x8x1xf32>
    %134 = vector.shape_cast %133 : vector<1x8x1xf32> to vector<8x1xf32>
    %135 = vector.broadcast %134 : vector<8x1xf32> to vector<8x32xf32>
    %136 = arith.mulf %131, %135 : vector<8x32xf32>
    %137 = arith.index_cast %c2_i32 : i32 to index
    %c0_51 = arith.constant 0 : index
    %c0_52 = arith.constant 0 : index
    %138 = vector.load %arg10[%137, %c0_51, %c0_52] : memref<8x8x32xf32, #tpu.memory_space<vmem>>, vector<1x8x32xf32>
    %139 = vector.shape_cast %138 : vector<1x8x32xf32> to vector<8x32xf32>
    %140 = vector.shape_cast %136 : vector<8x32xf32> to vector<1x8x32xf32>
    tpu.vector_store %arg10[%137, %c0_51, %c0_52], %140 {strides = array<i32>} : memref<8x8x32xf32, #tpu.memory_space<vmem>>, vector<1x8x32xf32>,
    %c3_i32 = arith.constant 3 : i32
    %cst_53 = arith.constant dense<0.000000e+00> : vector<8x128xf32>
    %141 = tpu.matmul %131, %21, %cst_53 {dimension_numbers = #tpu.dot_dimension_numbers<[1], [0], [0], [1], [0, 0, 1, 1], [], []>} : vector<8x32xf32>, vector<32x128xf32>, vector<8x128xf32> -> vector<8x128xf32>
    %142 = arith.index_cast %c3_i32 : i32 to index
    %c0_54 = arith.constant 0 : index
    %c0_55 = arith.constant 0 : index
    %143 = vector.load %arg11[%142, %c0_54, %c0_55] : memref<8x8x128xf32, #tpu.memory_space<vmem>>, vector<1x8x128xf32>
    %144 = vector.shape_cast %143 : vector<1x8x128xf32> to vector<8x128xf32>
    %145 = arith.addf %141, %144 : vector<8x128xf32>
    %146 = vector.extract_strided_slice %145 {offsets = [0, 0], sizes = [8, 32], strides = [1, 1]} : vector<8x128xf32> to vector<8x32xf32>
    %147 = arith.negf %146 : vector<8x32xf32>
    %148 = math.exp %147 : vector<8x32xf32>
    %cst_56 = arith.constant 1.000000e+00 : f32
    %149 = vector.broadcast %cst_56 : f32 to vector<8x32xf32>
    %150 = arith.addf %149, %148 : vector<8x32xf32>
    %151 = arith.divf %149, %150 : vector<8x32xf32>
    %152 = vector.extract_strided_slice %145 {offsets = [0, 32], sizes = [8, 32], strides = [1, 1]} : vector<8x128xf32> to vector<8x32xf32>
    %153 = arith.negf %152 : vector<8x32xf32>
    %154 = math.exp %153 : vector<8x32xf32>
    %cst_57 = arith.constant 1.000000e+00 : f32
    %155 = vector.broadcast %cst_57 : f32 to vector<8x32xf32>
    %156 = arith.addf %155, %154 : vector<8x32xf32>
    %157 = arith.divf %155, %156 : vector<8x32xf32>
    %158 = vector.extract_strided_slice %145 {offsets = [0, 64], sizes = [8, 32], strides = [1, 1]} : vector<8x128xf32> to vector<8x32xf32>
    %159 = math.tanh %158 : vector<8x32xf32>
    %160 = vector.extract_strided_slice %145 {offsets = [0, 96], sizes = [8, 32], strides = [1, 1]} : vector<8x128xf32> to vector<8x32xf32>
    %161 = arith.negf %160 : vector<8x32xf32>
    %162 = math.exp %161 : vector<8x32xf32>
    %cst_58 = arith.constant 1.000000e+00 : f32
    %163 = vector.broadcast %cst_58 : f32 to vector<8x32xf32>
    %164 = arith.addf %163, %162 : vector<8x32xf32>
    %165 = arith.divf %163, %164 : vector<8x32xf32>
    %166 = arith.mulf %157, %129 : vector<8x32xf32>
    %167 = arith.mulf %151, %159 : vector<8x32xf32>
    %168 = arith.addf %166, %167 : vector<8x32xf32>
    %169 = math.tanh %168 : vector<8x32xf32>
    %170 = arith.mulf %165, %169 : vector<8x32xf32>
    %171 = arith.index_cast %c3_i32 : i32 to index
    %c0_59 = arith.constant 0 : index
    %c0_60 = arith.constant 0 : index
    %172 = vector.load %arg2[%171, %c0_59, %c0_60] : memref<8x8x1xf32, #tpu.memory_space<vmem>>, vector<1x8x1xf32>
    %173 = vector.shape_cast %172 : vector<1x8x1xf32> to vector<8x1xf32>
    %174 = vector.broadcast %173 : vector<8x1xf32> to vector<8x32xf32>
    %175 = arith.mulf %170, %174 : vector<8x32xf32>
    %176 = arith.index_cast %c3_i32 : i32 to index
    %c0_61 = arith.constant 0 : index
    %c0_62 = arith.constant 0 : index
    %177 = vector.load %arg10[%176, %c0_61, %c0_62] : memref<8x8x32xf32, #tpu.memory_space<vmem>>, vector<1x8x32xf32>
    %178 = vector.shape_cast %177 : vector<1x8x32xf32> to vector<8x32xf32>
    %179 = vector.shape_cast %175 : vector<8x32xf32> to vector<1x8x32xf32>
    tpu.vector_store %arg10[%176, %c0_61, %c0_62], %179 {strides = array<i32>} : memref<8x8x32xf32, #tpu.memory_space<vmem>>, vector<1x8x32xf32>,
    %c4_i32 = arith.constant 4 : i32
    %cst_63 = arith.constant dense<0.000000e+00> : vector<8x128xf32>
    %180 = tpu.matmul %170, %21, %cst_63 {dimension_numbers = #tpu.dot_dimension_numbers<[1], [0], [0], [1], [0, 0, 1, 1], [], []>} : vector<8x32xf32>, vector<32x128xf32>, vector<8x128xf32> -> vector<8x128xf32>
    %181 = arith.index_cast %c4_i32 : i32 to index
    %c0_64 = arith.constant 0 : index
    %c0_65 = arith.constant 0 : index
    %182 = vector.load %arg11[%181, %c0_64, %c0_65] : memref<8x8x128xf32, #tpu.memory_space<vmem>>, vector<1x8x128xf32>
    %183 = vector.shape_cast %182 : vector<1x8x128xf32> to vector<8x128xf32>
    %184 = arith.addf %180, %183 : vector<8x128xf32>
    %185 = vector.extract_strided_slice %184 {offsets = [0, 0], sizes = [8, 32], strides = [1, 1]} : vector<8x128xf32> to vector<8x32xf32>
    %186 = arith.negf %185 : vector<8x32xf32>
    %187 = math.exp %186 : vector<8x32xf32>
    %cst_66 = arith.constant 1.000000e+00 : f32
    %188 = vector.broadcast %cst_66 : f32 to vector<8x32xf32>
    %189 = arith.addf %188, %187 : vector<8x32xf32>
    %190 = arith.divf %188, %189 : vector<8x32xf32>
    %191 = vector.extract_strided_slice %184 {offsets = [0, 32], sizes = [8, 32], strides = [1, 1]} : vector<8x128xf32> to vector<8x32xf32>
    %192 = arith.negf %191 : vector<8x32xf32>
    %193 = math.exp %192 : vector<8x32xf32>
    %cst_67 = arith.constant 1.000000e+00 : f32
    %194 = vector.broadcast %cst_67 : f32 to vector<8x32xf32>
    %195 = arith.addf %194, %193 : vector<8x32xf32>
    %196 = arith.divf %194, %195 : vector<8x32xf32>
    %197 = vector.extract_strided_slice %184 {offsets = [0, 64], sizes = [8, 32], strides = [1, 1]} : vector<8x128xf32> to vector<8x32xf32>
    %198 = math.tanh %197 : vector<8x32xf32>
    %199 = vector.extract_strided_slice %184 {offsets = [0, 96], sizes = [8, 32], strides = [1, 1]} : vector<8x128xf32> to vector<8x32xf32>
    %200 = arith.negf %199 : vector<8x32xf32>
    %201 = math.exp %200 : vector<8x32xf32>
    %cst_68 = arith.constant 1.000000e+00 : f32
    %202 = vector.broadcast %cst_68 : f32 to vector<8x32xf32>
    %203 = arith.addf %202, %201 : vector<8x32xf32>
    %204 = arith.divf %202, %203 : vector<8x32xf32>
    %205 = arith.mulf %196, %168 : vector<8x32xf32>
    %206 = arith.mulf %190, %198 : vector<8x32xf32>
    %207 = arith.addf %205, %206 : vector<8x32xf32>
    %208 = math.tanh %207 : vector<8x32xf32>
    %209 = arith.mulf %204, %208 : vector<8x32xf32>
    %210 = arith.index_cast %c4_i32 : i32 to index
    %c0_69 = arith.constant 0 : index
    %c0_70 = arith.constant 0 : index
    %211 = vector.load %arg2[%210, %c0_69, %c0_70] : memref<8x8x1xf32, #tpu.memory_space<vmem>>, vector<1x8x1xf32>
    %212 = vector.shape_cast %211 : vector<1x8x1xf32> to vector<8x1xf32>
    %213 = vector.broadcast %212 : vector<8x1xf32> to vector<8x32xf32>
    %214 = arith.mulf %209, %213 : vector<8x32xf32>
    %215 = arith.index_cast %c4_i32 : i32 to index
    %c0_71 = arith.constant 0 : index
    %c0_72 = arith.constant 0 : index
    %216 = vector.load %arg10[%215, %c0_71, %c0_72] : memref<8x8x32xf32, #tpu.memory_space<vmem>>, vector<1x8x32xf32>
    %217 = vector.shape_cast %216 : vector<1x8x32xf32> to vector<8x32xf32>
    %218 = vector.shape_cast %214 : vector<8x32xf32> to vector<1x8x32xf32>
    tpu.vector_store %arg10[%215, %c0_71, %c0_72], %218 {strides = array<i32>} : memref<8x8x32xf32, #tpu.memory_space<vmem>>, vector<1x8x32xf32>,
    %c5_i32 = arith.constant 5 : i32
    %cst_73 = arith.constant dense<0.000000e+00> : vector<8x128xf32>
    %219 = tpu.matmul %209, %21, %cst_73 {dimension_numbers = #tpu.dot_dimension_numbers<[1], [0], [0], [1], [0, 0, 1, 1], [], []>} : vector<8x32xf32>, vector<32x128xf32>, vector<8x128xf32> -> vector<8x128xf32>
    %220 = arith.index_cast %c5_i32 : i32 to index
    %c0_74 = arith.constant 0 : index
    %c0_75 = arith.constant 0 : index
    %221 = vector.load %arg11[%220, %c0_74, %c0_75] : memref<8x8x128xf32, #tpu.memory_space<vmem>>, vector<1x8x128xf32>
    %222 = vector.shape_cast %221 : vector<1x8x128xf32> to vector<8x128xf32>
    %223 = arith.addf %219, %222 : vector<8x128xf32>
    %224 = vector.extract_strided_slice %223 {offsets = [0, 0], sizes = [8, 32], strides = [1, 1]} : vector<8x128xf32> to vector<8x32xf32>
    %225 = arith.negf %224 : vector<8x32xf32>
    %226 = math.exp %225 : vector<8x32xf32>
    %cst_76 = arith.constant 1.000000e+00 : f32
    %227 = vector.broadcast %cst_76 : f32 to vector<8x32xf32>
    %228 = arith.addf %227, %226 : vector<8x32xf32>
    %229 = arith.divf %227, %228 : vector<8x32xf32>
    %230 = vector.extract_strided_slice %223 {offsets = [0, 32], sizes = [8, 32], strides = [1, 1]} : vector<8x128xf32> to vector<8x32xf32>
    %231 = arith.negf %230 : vector<8x32xf32>
    %232 = math.exp %231 : vector<8x32xf32>
    %cst_77 = arith.constant 1.000000e+00 : f32
    %233 = vector.broadcast %cst_77 : f32 to vector<8x32xf32>
    %234 = arith.addf %233, %232 : vector<8x32xf32>
    %235 = arith.divf %233, %234 : vector<8x32xf32>
    %236 = vector.extract_strided_slice %223 {offsets = [0, 64], sizes = [8, 32], strides = [1, 1]} : vector<8x128xf32> to vector<8x32xf32>
    %237 = math.tanh %236 : vector<8x32xf32>
    %238 = vector.extract_strided_slice %223 {offsets = [0, 96], sizes = [8, 32], strides = [1, 1]} : vector<8x128xf32> to vector<8x32xf32>
    %239 = arith.negf %238 : vector<8x32xf32>
    %240 = math.exp %239 : vector<8x32xf32>
    %cst_78 = arith.constant 1.000000e+00 : f32
    %241 = vector.broadcast %cst_78 : f32 to vector<8x32xf32>
    %242 = arith.addf %241, %240 : vector<8x32xf32>
    %243 = arith.divf %241, %242 : vector<8x32xf32>
    %244 = arith.mulf %235, %207 : vector<8x32xf32>
    %245 = arith.mulf %229, %237 : vector<8x32xf32>
    %246 = arith.addf %244, %245 : vector<8x32xf32>
    %247 = math.tanh %246 : vector<8x32xf32>
    %248 = arith.mulf %243, %247 : vector<8x32xf32>
    %249 = arith.index_cast %c5_i32 : i32 to index
    %c0_79 = arith.constant 0 : index
    %c0_80 = arith.constant 0 : index
    %250 = vector.load %arg2[%249, %c0_79, %c0_80] : memref<8x8x1xf32, #tpu.memory_space<vmem>>, vector<1x8x1xf32>
    %251 = vector.shape_cast %250 : vector<1x8x1xf32> to vector<8x1xf32>
    %252 = vector.broadcast %251 : vector<8x1xf32> to vector<8x32xf32>
    %253 = arith.mulf %248, %252 : vector<8x32xf32>
    %254 = arith.index_cast %c5_i32 : i32 to index
    %c0_81 = arith.constant 0 : index
    %c0_82 = arith.constant 0 : index
    %255 = vector.load %arg10[%254, %c0_81, %c0_82] : memref<8x8x32xf32, #tpu.memory_space<vmem>>, vector<1x8x32xf32>
    %256 = vector.shape_cast %255 : vector<1x8x32xf32> to vector<8x32xf32>
    %257 = vector.shape_cast %253 : vector<8x32xf32> to vector<1x8x32xf32>
    tpu.vector_store %arg10[%254, %c0_81, %c0_82], %257 {strides = array<i32>} : memref<8x8x32xf32, #tpu.memory_space<vmem>>, vector<1x8x32xf32>,
    %c6_i32 = arith.constant 6 : i32
    %cst_83 = arith.constant dense<0.000000e+00> : vector<8x128xf32>
    %258 = tpu.matmul %248, %21, %cst_83 {dimension_numbers = #tpu.dot_dimension_numbers<[1], [0], [0], [1], [0, 0, 1, 1], [], []>} : vector<8x32xf32>, vector<32x128xf32>, vector<8x128xf32> -> vector<8x128xf32>
    %259 = arith.index_cast %c6_i32 : i32 to index
    %c0_84 = arith.constant 0 : index
    %c0_85 = arith.constant 0 : index
    %260 = vector.load %arg11[%259, %c0_84, %c0_85] : memref<8x8x128xf32, #tpu.memory_space<vmem>>, vector<1x8x128xf32>
    %261 = vector.shape_cast %260 : vector<1x8x128xf32> to vector<8x128xf32>
    %262 = arith.addf %258, %261 : vector<8x128xf32>
    %263 = vector.extract_strided_slice %262 {offsets = [0, 0], sizes = [8, 32], strides = [1, 1]} : vector<8x128xf32> to vector<8x32xf32>
    %264 = arith.negf %263 : vector<8x32xf32>
    %265 = math.exp %264 : vector<8x32xf32>
    %cst_86 = arith.constant 1.000000e+00 : f32
    %266 = vector.broadcast %cst_86 : f32 to vector<8x32xf32>
    %267 = arith.addf %266, %265 : vector<8x32xf32>
    %268 = arith.divf %266, %267 : vector<8x32xf32>
    %269 = vector.extract_strided_slice %262 {offsets = [0, 32], sizes = [8, 32], strides = [1, 1]} : vector<8x128xf32> to vector<8x32xf32>
    %270 = arith.negf %269 : vector<8x32xf32>
    %271 = math.exp %270 : vector<8x32xf32>
    %cst_87 = arith.constant 1.000000e+00 : f32
    %272 = vector.broadcast %cst_87 : f32 to vector<8x32xf32>
    %273 = arith.addf %272, %271 : vector<8x32xf32>
    %274 = arith.divf %272, %273 : vector<8x32xf32>
    %275 = vector.extract_strided_slice %262 {offsets = [0, 64], sizes = [8, 32], strides = [1, 1]} : vector<8x128xf32> to vector<8x32xf32>
    %276 = math.tanh %275 : vector<8x32xf32>
    %277 = vector.extract_strided_slice %262 {offsets = [0, 96], sizes = [8, 32], strides = [1, 1]} : vector<8x128xf32> to vector<8x32xf32>
    %278 = arith.negf %277 : vector<8x32xf32>
    %279 = math.exp %278 : vector<8x32xf32>
    %cst_88 = arith.constant 1.000000e+00 : f32
    %280 = vector.broadcast %cst_88 : f32 to vector<8x32xf32>
    %281 = arith.addf %280, %279 : vector<8x32xf32>
    %282 = arith.divf %280, %281 : vector<8x32xf32>
    %283 = arith.mulf %274, %246 : vector<8x32xf32>
    %284 = arith.mulf %268, %276 : vector<8x32xf32>
    %285 = arith.addf %283, %284 : vector<8x32xf32>
    %286 = math.tanh %285 : vector<8x32xf32>
    %287 = arith.mulf %282, %286 : vector<8x32xf32>
    %288 = arith.index_cast %c6_i32 : i32 to index
    %c0_89 = arith.constant 0 : index
    %c0_90 = arith.constant 0 : index
    %289 = vector.load %arg2[%288, %c0_89, %c0_90] : memref<8x8x1xf32, #tpu.memory_space<vmem>>, vector<1x8x1xf32>
    %290 = vector.shape_cast %289 : vector<1x8x1xf32> to vector<8x1xf32>
    %291 = vector.broadcast %290 : vector<8x1xf32> to vector<8x32xf32>
    %292 = arith.mulf %287, %291 : vector<8x32xf32>
    %293 = arith.index_cast %c6_i32 : i32 to index
    %c0_91 = arith.constant 0 : index
    %c0_92 = arith.constant 0 : index
    %294 = vector.load %arg10[%293, %c0_91, %c0_92] : memref<8x8x32xf32, #tpu.memory_space<vmem>>, vector<1x8x32xf32>
    %295 = vector.shape_cast %294 : vector<1x8x32xf32> to vector<8x32xf32>
    %296 = vector.shape_cast %292 : vector<8x32xf32> to vector<1x8x32xf32>
    tpu.vector_store %arg10[%293, %c0_91, %c0_92], %296 {strides = array<i32>} : memref<8x8x32xf32, #tpu.memory_space<vmem>>, vector<1x8x32xf32>,
    %c7_i32 = arith.constant 7 : i32
    %cst_93 = arith.constant dense<0.000000e+00> : vector<8x128xf32>
    %297 = tpu.matmul %287, %21, %cst_93 {dimension_numbers = #tpu.dot_dimension_numbers<[1], [0], [0], [1], [0, 0, 1, 1], [], []>} : vector<8x32xf32>, vector<32x128xf32>, vector<8x128xf32> -> vector<8x128xf32>
    %298 = arith.index_cast %c7_i32 : i32 to index
    %c0_94 = arith.constant 0 : index
    %c0_95 = arith.constant 0 : index
    %299 = vector.load %arg11[%298, %c0_94, %c0_95] : memref<8x8x128xf32, #tpu.memory_space<vmem>>, vector<1x8x128xf32>
    %300 = vector.shape_cast %299 : vector<1x8x128xf32> to vector<8x128xf32>
    %301 = arith.addf %297, %300 : vector<8x128xf32>
    %302 = vector.extract_strided_slice %301 {offsets = [0, 0], sizes = [8, 32], strides = [1, 1]} : vector<8x128xf32> to vector<8x32xf32>
    %303 = arith.negf %302 : vector<8x32xf32>
    %304 = math.exp %303 : vector<8x32xf32>
    %cst_96 = arith.constant 1.000000e+00 : f32
    %305 = vector.broadcast %cst_96 : f32 to vector<8x32xf32>
    %306 = arith.addf %305, %304 : vector<8x32xf32>
    %307 = arith.divf %305, %306 : vector<8x32xf32>
    %308 = vector.extract_strided_slice %301 {offsets = [0, 32], sizes = [8, 32], strides = [1, 1]} : vector<8x128xf32> to vector<8x32xf32>
    %309 = arith.negf %308 : vector<8x32xf32>
    %310 = math.exp %309 : vector<8x32xf32>
    %cst_97 = arith.constant 1.000000e+00 : f32
    %311 = vector.broadcast %cst_97 : f32 to vector<8x32xf32>
    %312 = arith.addf %311, %310 : vector<8x32xf32>
    %313 = arith.divf %311, %312 : vector<8x32xf32>
    %314 = vector.extract_strided_slice %301 {offsets = [0, 64], sizes = [8, 32], strides = [1, 1]} : vector<8x128xf32> to vector<8x32xf32>
    %315 = math.tanh %314 : vector<8x32xf32>
    %316 = vector.extract_strided_slice %301 {offsets = [0, 96], sizes = [8, 32], strides = [1, 1]} : vector<8x128xf32> to vector<8x32xf32>
    %317 = arith.negf %316 : vector<8x32xf32>
    %318 = math.exp %317 : vector<8x32xf32>
    %cst_98 = arith.constant 1.000000e+00 : f32
    %319 = vector.broadcast %cst_98 : f32 to vector<8x32xf32>
    %320 = arith.addf %319, %318 : vector<8x32xf32>
    %321 = arith.divf %319, %320 : vector<8x32xf32>
    %322 = arith.mulf %313, %285 : vector<8x32xf32>
    %323 = arith.mulf %307, %315 : vector<8x32xf32>
    %324 = arith.addf %322, %323 : vector<8x32xf32>
    %325 = math.tanh %324 : vector<8x32xf32>
    %326 = arith.mulf %321, %325 : vector<8x32xf32>
    %327 = arith.index_cast %c7_i32 : i32 to index
    %c0_99 = arith.constant 0 : index
    %c0_100 = arith.constant 0 : index
    %328 = vector.load %arg2[%327, %c0_99, %c0_100] : memref<8x8x1xf32, #tpu.memory_space<vmem>>, vector<1x8x1xf32>
    %329 = vector.shape_cast %328 : vector<1x8x1xf32> to vector<8x1xf32>
    %330 = vector.broadcast %329 : vector<8x1xf32> to vector<8x32xf32>
    %331 = arith.mulf %326, %330 : vector<8x32xf32>
    %332 = arith.index_cast %c7_i32 : i32 to index
    %c0_101 = arith.constant 0 : index
    %c0_102 = arith.constant 0 : index
    %333 = vector.load %arg10[%332, %c0_101, %c0_102] : memref<8x8x32xf32, #tpu.memory_space<vmem>>, vector<1x8x32xf32>
    %334 = vector.shape_cast %333 : vector<1x8x32xf32> to vector<8x32xf32>
    %335 = vector.shape_cast %331 : vector<8x32xf32> to vector<1x8x32xf32>
    tpu.vector_store %arg10[%332, %c0_101, %c0_102], %335 {strides = array<i32>} : memref<8x8x32xf32, #tpu.memory_space<vmem>>, vector<1x8x32xf32>,
    %c8_i32 = arith.constant 8 : i32
    return
  }
  func.func @transform_0(%arg0: i32) -> (i32, i32, i32) {
    %c0_i32 = arith.constant 0 : i32
    %c0_i32_0 = arith.constant 0 : i32
    %c0_i32_1 = arith.constant 0 : i32
    return %c0_i32, %arg0, %c0_i32_0 : i32, i32, i32
  }
  func.func @transform_1(%arg0: i32) -> (i32, i32, i32) {
    %c0_i32 = arith.constant 0 : i32
    %c0_i32_0 = arith.constant 0 : i32
    %c0_i32_1 = arith.constant 0 : i32
    return %c0_i32, %arg0, %c0_i32_0 : i32, i32, i32
  }
  func.func @transform_2(%arg0: i32) -> (i32, i32) {
    %c0_i32 = arith.constant 0 : i32
    %c0_i32_0 = arith.constant 0 : i32
    %c0_i32_1 = arith.constant 0 : i32
    return %c0_i32, %c0_i32_0 : i32, i32
  }
  func.func @transform_3(%arg0: i32) -> (i32, i32) {
    %c0_i32 = arith.constant 0 : i32
    %c0_i32_0 = arith.constant 0 : i32
    %c0_i32_1 = arith.constant 0 : i32
    return %c0_i32, %c0_i32_0 : i32, i32
  }
  func.func @transform_4(%arg0: i32) -> (i32, i32) {
    %c0_i32 = arith.constant 0 : i32
    %c0_i32_0 = arith.constant 0 : i32
    %c0_i32_1 = arith.constant 0 : i32
    return %c0_i32, %c0_i32_0 : i32, i32
  }
  func.func @transform_5(%arg0: i32) -> (i32, i32) {
    %c0_i32 = arith.constant 0 : i32
    %c0_i32_0 = arith.constant 0 : i32
    %c0_i32_1 = arith.constant 0 : i32
    return %c0_i32, %c0_i32_0 : i32, i32
  }
  func.func @transform_6(%arg0: i32) -> (i32, i32) {
    %c0_i32 = arith.constant 0 : i32
    %c0_i32_0 = arith.constant 0 : i32
    %c0_i32_1 = arith.constant 0 : i32
    return %c0_i32, %c0_i32_0 : i32, i32
  }
  func.func @transform_7(%arg0: i32) -> (i32, i32) {
    %c0_i32 = arith.constant 0 : i32
    %c0_i32_0 = arith.constant 0 : i32
    %c0_i32_1 = arith.constant 0 : i32
    return %c0_i32, %c0_i32_0 : i32, i32
  }
  func.func @transform_8(%arg0: i32) -> (i32, i32) {
    %c0_i32 = arith.constant 0 : i32
    %c0_i32_0 = arith.constant 0 : i32
    %c0_i32_1 = arith.constant 0 : i32
    return %c0_i32, %c0_i32_0 : i32, i32
  }
  func.func @transform_9(%arg0: i32) -> (i32, i32, i32) {
    %c0_i32 = arith.constant 0 : i32
    %c0_i32_0 = arith.constant 0 : i32
    %c0_i32_1 = arith.constant 0 : i32
    return %c0_i32, %arg0, %c0_i32_0 : i32, i32, i32
  }
}

</mosaic_0001>

<llo_original>
// kernel: tpu_custom_call.1
$region0: #{tpu_custom_call.1}
  #allocation0 [shape = 'u32[]', space=smem, size = 0x4, offset = 0x4, fixed_abs, tag = 'smem constant byte address 0x4 - core index']
  #allocation1 [shape = 'u32[144,128]{1,0:T(1,128)}', space=vmem, size = 0x12000, scoped, tag = 'internal scratch']
  #allocation2 [shape = 'f32[8,8,128]{2,1,0:T(8,128)}', space=vmem, size = 0x8000, scoped, tag = 'scratch operand']
  %s0 = inlined_call_operand.vmem [shape: f32[8,8,8], index: 0, kind: input, shape index: {}]
  %s1 = inlined_call_operand.vmem [shape: f32[8,8,1], index: 1, kind: input, shape index: {}]
  %s2 = inlined_call_operand.vmem [shape: f32[8,64], index: 2, kind: input, shape index: {}]
  %s3 = inlined_call_operand.vmem [shape: f32[1,64], index: 3, kind: input, shape index: {}]
  %s4 = inlined_call_operand.vmem [shape: f32[64,32], index: 4, kind: input, shape index: {}]
  %s5 = inlined_call_operand.vmem [shape: f32[1,32], index: 5, kind: input, shape index: {}]
  %s6 = inlined_call_operand.vmem [shape: f32[32,128], index: 6, kind: input, shape index: {}]
  %s7 = inlined_call_operand.vmem [shape: f32[1,128], index: 7, kind: input, shape index: {}]
  %s8 = inlined_call_operand.vmem [shape: f32[32,128], index: 8, kind: input, shape index: {}]
  %s9 = inlined_call_operand.hbm [shape: f32[8,8,32], index: 9, kind: output, shape index: {}]
  %s10 = sld [smem:[#allocation0]]
  $region46: #{tpu_custom_call.1} parent=0
    _
  %s12 = ssub.s32 1, %s10
  %s13 = scalar_select 0, %s12, %s10
  $region1: #{tpu_custom_call.1} parent=0
    #allocation3 [shape = 'u8[32768]{0}', space=vmem, size = 0x8000, scoped, tag = 'output window, operand 0, single buffered']
    #allocation4 [shape = 's32[1]{0}', space=sflag, size = 0x4, scoped, tag = 'scoped memory for tpu_custom_call.1']
    %14 = vsyncpa [#allocation4], 0
    // Predicated region
    $region2: #{tpu_custom_call.1} parent=1 // pred_check
      _
    $region3: #{tpu_custom_call.1} parent=1 // pred_check_branch
      %16 = sbr.rel (0) target = $region5
    $region4: #{tpu_custom_call.1} parent=1 // pred_region
      _
    $region5: #{tpu_custom_call.1} parent=1 // pred_fallthru
      _
    // Predicated region
    $region6: #{tpu_custom_call.1} parent=1 // pred_check
      _
    $region7: #{tpu_custom_call.1} parent=1 // pred_check_branch
      %18 = sbr.rel (0) target = $region9
    $region8: #{tpu_custom_call.1} parent=1 // pred_region
      _
    $region9: #{tpu_custom_call.1} parent=1 // pred_fallthru
      _
    // Predicated region
    $region10: #{tpu_custom_call.1} parent=1 // pred_check
      _
    $region11: #{tpu_custom_call.1} parent=1 // pred_check_branch
      %20 = sbr.rel (0) target = $region13
    $region12: #{tpu_custom_call.1} parent=1 // pred_region
      _
    $region13: #{tpu_custom_call.1} parent=1 // pred_fallthru
      _
    // Predicated region
    $region14: #{tpu_custom_call.1} parent=1 // pred_check
      _
    $region15: #{tpu_custom_call.1} parent=1 // pred_check_branch
      %22 = sbr.rel (0) target = $region17
    $region16: #{tpu_custom_call.1} parent=1 // pred_region
      _
    $region17: #{tpu_custom_call.1} parent=1 // pred_fallthru
      _
    // Predicated region
    $region18: #{tpu_custom_call.1} parent=1 // pred_check
      _
    $region19: #{tpu_custom_call.1} parent=1 // pred_check_branch
      %24 = sbr.rel (0) target = $region21
    $region20: #{tpu_custom_call.1} parent=1 // pred_region
      _
    $region21: #{tpu_custom_call.1} parent=1 // pred_fallthru
      _
    // Predicated region
    $region22: #{tpu_custom_call.1} parent=1 // pred_check
      _
    $region23: #{tpu_custom_call.1} parent=1 // pred_check_branch
      %26 = sbr.rel (0) target = $region25
    $region24: #{tpu_custom_call.1} parent=1 // pred_region
      _
    $region25: #{tpu_custom_call.1} parent=1 // pred_fallthru
      _
    // Predicated region
    $region26: #{tpu_custom_call.1} parent=1 // pred_check
      _
    $region27: #{tpu_custom_call.1} parent=1 // pred_check_branch
      %28 = sbr.rel (0) target = $region29
    $region28: #{tpu_custom_call.1} parent=1 // pred_region
      _
    $region29: #{tpu_custom_call.1} parent=1 // pred_fallthru
      _
    // Predicated region
    $region30: #{tpu_custom_call.1} parent=1 // pred_check
      _
    $region31: #{tpu_custom_call.1} parent=1 // pred_check_branch
      %30 = sbr.rel (0) target = $region33
    $region32: #{tpu_custom_call.1} parent=1 // pred_region
      _
    $region33: #{tpu_custom_call.1} parent=1 // pred_fallthru
      _
    // Predicated region
    $region34: #{tpu_custom_call.1} parent=1 // pred_check
      _
    $region35: #{tpu_custom_call.1} parent=1 // pred_check_branch
      %32 = sbr.rel (0) target = $region37
    $region36: #{tpu_custom_call.1} parent=1 // pred_region
      _
    $region37: #{tpu_custom_call.1} parent=1 // pred_fallthru
      _
    %v33 = vld [vmem:[%s0] sm:$0xff]
    %v34 = vld [vmem:[%s0 + $0x8] sm:$0xff]
    %v35 = vld [vmem:[%s0 + $0x10] sm:$0xff]
    %v36 = vld [vmem:[%s0 + $0x18] sm:$0xff]
    %v37 = vld [vmem:[%s0 + $0x20] sm:$0xff]
    %v38 = vld [vmem:[%s0 + $0x28] sm:$0xff]
    %v39 = vld [vmem:[%s0 + $0x30] sm:$0xff]
    %v40 = vld [vmem:[%s0 + $0x38] sm:$0xff]
    %v41 = vld [vmem:[%s2] sm:$0xff]
    %v42 = vld [vmem:[%s3] sm:$0x1]
    %v44 = vlaneseq
    %v45 = vshrl.u32 %v44, 7
    %v46 = vsub.s32 0, %v45
    %v47 = vrot.slane %v42, %v46
    %vm49 = vcmask 64512
    %v51 = vsel %vm49, %v33, 0
    %v54 = vsel %vm49, %v34, 0
    %v57 = vsel %vm49, %v35, 0
    %v60 = vsel %vm49, %v36, 0
    %v63 = vsel %vm49, %v37, 0
    %v66 = vsel %vm49, %v38, 0
    %v69 = vsel %vm49, %v39, 0
    %v72 = vsel %vm49, %v40, 0
    %74 = vmatprep.subr.mxu0 0.0
    %75 = vmatpush1.msra.mxu0 %v41
    %76 = vmatprep.subr.mxu0 0.0
    %77 = vmatpush1.msra.mxu0 0.0
    %78 = vmatprep.subr.mxu0 0.0
    %79 = vmatpush1.msra.mxu0 0.0
    %80 = vmatprep.subr.mxu0 0.0
    %81 = vmatpush1.msra.mxu0 0.0
    %82 = vmatprep.subr.mxu0 0.0
    %83 = vmatpush1.msra.mxu0 0.0
    %84 = vmatprep.subr.mxu0 0.0
    %85 = vmatpush1.msra.mxu0 0.0
    %86 = vmatprep.subr.mxu0 0.0
    %87 = vmatpush1.msra.mxu0 0.0
    %88 = vmatprep.subr.mxu0 0.0
    %89 = vmatpush1.msra.mxu0 0.0
    %90 = vmatprep.subr.mxu0 0.0
    %91 = vmatpush1.msra.mxu0 0.0
    %92 = vmatprep.subr.mxu0 0.0
    %93 = vmatpush1.msra.mxu0 0.0
    %94 = vmatprep.subr.mxu0 0.0
    %95 = vmatpush1.msra.mxu0 0.0
    %96 = vmatprep.subr.mxu0 0.0
    %97 = vmatpush1.msra.mxu0 0.0
    %98 = vmatprep.subr.mxu0 0.0
    %99 = vmatpush1.msra.mxu0 0.0
    %100 = vmatprep.subr.mxu0 0.0
    %101 = vmatpush1.msra.mxu0 0.0
    %102 = vmatprep.subr.mxu0 0.0
    %103 = vmatpush1.msra.mxu0 0.0
    %104 = vmatprep.subr.mxu0 0.0
    %105 = vmatpush1.msra.mxu0 0.0
    %106 = vmatprep.subr.mxu0 0.0
    %107 = vmatpush1.msra.mxu0 0.0
    %108 = vmatprep.subr.mxu0 0.0
    %109 = vmatpush1.msra.mxu0 0.0
    %110 = vmatprep.subr.mxu0 0.0
    %111 = vmatpush1.msra.mxu0 0.0
    %112 = vmatprep.subr.mxu0 0.0
    %113 = vmatpush1.msra.mxu0 0.0
    %114 = vmatprep.subr.mxu0 0.0
    %115 = vmatpush1.msra.mxu0 0.0
    %116 = vmatprep.subr.mxu0 0.0
    %117 = vmatpush1.msra.mxu0 0.0
    %118 = vmatprep.subr.mxu0 0.0
    %119 = vmatpush1.msra.mxu0 0.0
    %120 = vmatprep.subr.mxu0 0.0
    %121 = vmatpush1.msra.mxu0 0.0
    %122 = vmatprep.subr.mxu0 0.0
    %123 = vmatpush1.msra.mxu0 0.0
    %124 = vmatprep.subr.mxu0 0.0
    %125 = vmatpush1.msra.mxu0 0.0
    %126 = vmatprep.subr.mxu0 0.0
    %127 = vmatpush1.msra.mxu0 0.0
    %128 = vmatprep.subr.mxu0 0.0
    %129 = vmatpush1.msra.mxu0 0.0
    %130 = vmatprep.subr.mxu0 0.0
    %131 = vmatpush1.msra.mxu0 0.0
    %132 = vmatprep.subr.mxu0 0.0
    %133 = vmatpush1.msra.mxu0 0.0
    %134 = vmatprep.subr.mxu0 0.0
    %135 = vmatpush1.msra.mxu0 0.0
    %136 = vmatprep.subr.mxu0 0.0
    %137 = vmatpush1.msra.mxu0 0.0
    %138 = vmatprep.mubr.f32.mxu0 0.0
    %139 = vmatmul.mubr.f32.gmra.mrb[0].mxu0 %v51
    %v140 = vpop.f32.mrb[0].mxu0
    %v141 = vadd.f32 %v47, %v140
    %v142 = vpop.f32.mrb[0].mxu0
    %143 = vmatprep.mubr.f32.mxu0 0.0
    %144 = vmatmul.mubr.f32.gmra.mrb[0].mxu0 %v54
    %v145 = vpop.f32.mrb[0].mxu0
    %v146 = vadd.f32 %v47, %v145
    %v147 = vpop.f32.mrb[0].mxu0
    %148 = vmatprep.mubr.f32.mxu0 0.0
    %149 = vmatmul.mubr.f32.gmra.mrb[0].mxu0 %v57
    %v150 = vpop.f32.mrb[0].mxu0
    %v151 = vadd.f32 %v47, %v150
    %v152 = vpop.f32.mrb[0].mxu0
    %153 = vmatprep.mubr.f32.mxu0 0.0
    %154 = vmatmul.mubr.f32.gmra.mrb[0].mxu0 %v60
    %v155 = vpop.f32.mrb[0].mxu0
    %v156 = vadd.f32 %v47, %v155
    %v157 = vpop.f32.mrb[0].mxu0
    %158 = vmatprep.mubr.f32.mxu0 0.0
    %159 = vmatmul.mubr.f32.gmra.mrb[0].mxu0 %v63
    %v160 = vpop.f32.mrb[0].mxu0
    %v161 = vadd.f32 %v47, %v160
    %v162 = vpop.f32.mrb[0].mxu0
    %163 = vmatprep.mubr.f32.mxu0 0.0
    %164 = vmatmul.mubr.f32.gmra.mrb[0].mxu0 %v66
    %v165 = vpop.f32.mrb[0].mxu0
    %v166 = vadd.f32 %v47, %v165
    %v167 = vpop.f32.mrb[0].mxu0
    %168 = vmatprep.mubr.f32.mxu0 0.0
    %169 = vmatmul.mubr.f32.gmra.mrb[0].mxu0 %v69
    %v170 = vpop.f32.mrb[0].mxu0
    %v171 = vadd.f32 %v47, %v170
    %v172 = vpop.f32.mrb[0].mxu0
    %173 = vmatprep.mubr.f32.mxu0 0.0
    %174 = vmatmul.mubr.f32.gmra.mrb[0].mxu0 %v72
    %v175 = vpop.f32.mrb[0].mxu0
    %v176 = vadd.f32 %v47, %v175
    %v177 = vpop.f32.mrb[0].mxu0
    %178 = vdwg.mxu0
    %v179 = vtanh.pop %v141
    %v180 = vtanh.pop %v146
    %v181 = vtanh.pop %v151
    %v182 = vtanh.pop %v156
    %v183 = vtanh.pop %v161
    %v184 = vtanh.pop %v166
    %v185 = vtanh.pop %v171
    %v186 = vtanh.pop %v176
    %v187 = vld [vmem:[%s4] sm:$0xff]
    %v188 = vld [vmem:[%s4 + $0x8] sm:$0xff]
    %v189 = vld [vmem:[%s4 + $0x10] sm:$0xff]
    %v190 = vld [vmem:[%s4 + $0x18] sm:$0xff]
    %v191 = vld [vmem:[%s4 + $0x20] sm:$0xff]
    %v192 = vld [vmem:[%s4 + $0x28] sm:$0xff]
    %v193 = vld [vmem:[%s4 + $0x30] sm:$0xff]
    %v194 = vld [vmem:[%s4 + $0x38] sm:$0xff]
    %v195 = vld [vmem:[%s5] sm:$0x1]
    %v197 = vlaneseq
    %v198 = vshrl.u32 %v197, 7
    %v199 = vsub.s32 0, %v198
    %v200 = vrot.slane %v195, %v199
    %vm202 = vcmask 523264
    %v204 = vsel %vm202, %v179, 0
    %v207 = vsel %vm202, %v180, 0
    %v210 = vsel %vm202, %v181, 0
    %v213 = vsel %vm202, %v182, 0
    %v216 = vsel %vm202, %v183, 0
    %v219 = vsel %vm202, %v184, 0
    %v222 = vsel %vm202, %v185, 0
    %v225 = vsel %vm202, %v186, 0
    %227 = vmatprep.subr.mxu0 0.0
    %228 = vmatpush1.msra.mxu0 %v187
    %229 = vmatprep.subr.mxu0 0.0
    %230 = vmatpush1.msra.mxu0 %v188
    %231 = vmatprep.subr.mxu0 0.0
    %232 = vmatpush1.msra.mxu0 %v189
    %233 = vmatprep.subr.mxu0 0.0
    %234 = vmatpush1.msra.mxu0 %v190
    %235 = vmatprep.subr.mxu0 0.0
    %236 = vmatpush1.msra.mxu0 %v191
    %237 = vmatprep.subr.mxu0 0.0
    %238 = vmatpush1.msra.mxu0 %v192
    %239 = vmatprep.subr.mxu0 0.0
    %240 = vmatpush1.msra.mxu0 %v193
    %241 = vmatprep.subr.mxu0 0.0
    %242 = vmatpush1.msra.mxu0 %v194
    %243 = vmatprep.subr.mxu0 0.0
    %244 = vmatpush1.msra.mxu0 0.0
    %245 = vmatprep.subr.mxu0 0.0
    %246 = vmatpush1.msra.mxu0 0.0
    %247 = vmatprep.subr.mxu0 0.0
    %248 = vmatpush1.msra.mxu0 0.0
    %249 = vmatprep.subr.mxu0 0.0
    %250 = vmatpush1.msra.mxu0 0.0
    %251 = vmatprep.subr.mxu0 0.0
    %252 = vmatpush1.msra.mxu0 0.0
    %253 = vmatprep.subr.mxu0 0.0
    %254 = vmatpush1.msra.mxu0 0.0
    %255 = vmatprep.subr.mxu0 0.0
    %256 = vmatpush1.msra.mxu0 0.0
    %257 = vmatprep.subr.mxu0 0.0
    %258 = vmatpush1.msra.mxu0 0.0
    %259 = vmatprep.subr.mxu0 0.0
    %260 = vmatpush1.msra.mxu0 0.0
    %261 = vmatprep.subr.mxu0 0.0
    %262 = vmatpush1.msra.mxu0 0.0
    %263 = vmatprep.subr.mxu0 0.0
    %264 = vmatpush1.msra.mxu0 0.0
    %265 = vmatprep.subr.mxu0 0.0
    %266 = vmatpush1.msra.mxu0 0.0
    %267 = vmatprep.subr.mxu0 0.0
    %268 = vmatpush1.msra.mxu0 0.0
    %269 = vmatprep.subr.mxu0 0.0
    %270 = vmatpush1.msra.mxu0 0.0
    %271 = vmatprep.subr.mxu0 0.0
    %272 = vmatpush1.msra.mxu0 0.0
    %273 = vmatprep.subr.mxu0 0.0
    %274 = vmatpush1.msra.mxu0 0.0
    %275 = vmatprep.subr.mxu0 0.0
    %276 = vmatpush1.msra.mxu0 0.0
    %277 = vmatprep.subr.mxu0 0.0
    %278 = vmatpush1.msra.mxu0 0.0
    %279 = vmatprep.subr.mxu0 0.0
    %280 = vmatpush1.msra.mxu0 0.0
    %281 = vmatprep.subr.mxu0 0.0
    %282 = vmatpush1.msra.mxu0 0.0
    %283 = vmatprep.subr.mxu0 0.0
    %284 = vmatpush1.msra.mxu0 0.0
    %285 = vmatprep.subr.mxu0 0.0
    %286 = vmatpush1.msra.mxu0 0.0
    %287 = vmatprep.subr.mxu0 0.0
    %288 = vmatpush1.msra.mxu0 0.0
    %289 = vmatprep.subr.mxu0 0.0
    %290 = vmatpush1.msra.mxu0 0.0
    %291 = vmatprep.mubr.f32.mxu0 0.0
    %292 = vmatmul.mubr.f32.gmra.mrb[0].mxu0 %v204
    %v293 = vpop.f32.mrb[0].mxu0
    %v294 = vadd.f32 %v200, %v293
    %v295 = vpop.f32.mrb[0].mxu0
    %296 = vmatprep.mubr.f32.mxu0 0.0
    %297 = vmatmul.mubr.f32.gmra.mrb[0].mxu0 %v207
    %v298 = vpop.f32.mrb[0].mxu0
    %v299 = vadd.f32 %v200, %v298
    %v300 = vpop.f32.mrb[0].mxu0
    %301 = vmatprep.mubr.f32.mxu0 0.0
    %302 = vmatmul.mubr.f32.gmra.mrb[0].mxu0 %v210
    %v303 = vpop.f32.mrb[0].mxu0
    %v304 = vadd.f32 %v200, %v303
    %v305 = vpop.f32.mrb[0].mxu0
    %306 = vmatprep.mubr.f32.mxu0 0.0
    %307 = vmatmul.mubr.f32.gmra.mrb[0].mxu0 %v213
    %v308 = vpop.f32.mrb[0].mxu0
    %v309 = vadd.f32 %v200, %v308
    %v310 = vpop.f32.mrb[0].mxu0
    %311 = vmatprep.mubr.f32.mxu0 0.0
    %312 = vmatmul.mubr.f32.gmra.mrb[0].mxu0 %v216
    %v313 = vpop.f32.mrb[0].mxu0
    %v314 = vadd.f32 %v200, %v313
    %v315 = vpop.f32.mrb[0].mxu0
    %316 = vmatprep.mubr.f32.mxu0 0.0
    %317 = vmatmul.mubr.f32.gmra.mrb[0].mxu0 %v219
    %v318 = vpop.f32.mrb[0].mxu0
    %v319 = vadd.f32 %v200, %v318
    %v320 = vpop.f32.mrb[0].mxu0
    %321 = vmatprep.mubr.f32.mxu0 0.0
    %322 = vmatmul.mubr.f32.gmra.mrb[0].mxu0 %v222
    %v323 = vpop.f32.mrb[0].mxu0
    %v324 = vadd.f32 %v200, %v323
    %v325 = vpop.f32.mrb[0].mxu0
    %326 = vmatprep.mubr.f32.mxu0 0.0
    %327 = vmatmul.mubr.f32.gmra.mrb[0].mxu0 %v225
    %v328 = vpop.f32.mrb[0].mxu0
    %v329 = vadd.f32 %v200, %v328
    %v330 = vpop.f32.mrb[0].mxu0
    %331 = vdwg.mxu0
    %v332 = vtanh.pop %v294
    %v333 = vtanh.pop %v299
    %v334 = vtanh.pop %v304
    %v335 = vtanh.pop %v309
    %v336 = vtanh.pop %v314
    %v337 = vtanh.pop %v319
    %v338 = vtanh.pop %v324
    %v339 = vtanh.pop %v329
    %v340 = vld [vmem:[%s6] sm:$0xff]
    %v341 = vld [vmem:[%s6 + $0x8] sm:$0xff]
    %v342 = vld [vmem:[%s6 + $0x10] sm:$0xff]
    %v343 = vld [vmem:[%s6 + $0x18] sm:$0xff]
    %v344 = vld [vmem:[%s7] sm:$0x1]
    %v346 = vlaneseq
    %v347 = vshrl.u32 %v346, 7
    %v348 = vsub.s32 0, %v347
    %v349 = vrot.slane %v344, %v348
    %vm351 = vcmask 261120
    %v353 = vsel %vm351, %v332, 0
    %v356 = vsel %vm351, %v333, 0
    %v359 = vsel %vm351, %v334, 0
    %v362 = vsel %vm351, %v335, 0
    %v365 = vsel %vm351, %v336, 0
    %v368 = vsel %vm351, %v337, 0
    %v371 = vsel %vm351, %v338, 0
    %v374 = vsel %vm351, %v339, 0
    %376 = vmatprep.subr.mxu0 0.0
    %377 = vmatpush1.msra.mxu0 %v340
    %378 = vmatprep.subr.mxu0 0.0
    %379 = vmatpush1.msra.mxu0 %v341
    %380 = vmatprep.subr.mxu0 0.0
    %381 = vmatpush1.msra.mxu0 %v342
    %382 = vmatprep.subr.mxu0 0.0
    %383 = vmatpush1.msra.mxu0 %v343
    %384 = vmatprep.subr.mxu0 0.0
    %385 = vmatpush1.msra.mxu0 0.0
    %386 = vmatprep.subr.mxu0 0.0
    %387 = vmatpush1.msra.mxu0 0.0
    %388 = vmatprep.subr.mxu0 0.0
    %389 = vmatpush1.msra.mxu0 0.0
    %390 = vmatprep.subr.mxu0 0.0
    %391 = vmatpush1.msra.mxu0 0.0
    %392 = vmatprep.subr.mxu0 0.0
    %393 = vmatpush1.msra.mxu0 0.0
    %394 = vmatprep.subr.mxu0 0.0
    %395 = vmatpush1.msra.mxu0 0.0
    %396 = vmatprep.subr.mxu0 0.0
    %397 = vmatpush1.msra.mxu0 0.0
    %398 = vmatprep.subr.mxu0 0.0
    %399 = vmatpush1.msra.mxu0 0.0
    %400 = vmatprep.subr.mxu0 0.0
    %401 = vmatpush1.msra.mxu0 0.0
    %402 = vmatprep.subr.mxu0 0.0
    %403 = vmatpush1.msra.mxu0 0.0
    %404 = vmatprep.subr.mxu0 0.0
    %405 = vmatpush1.msra.mxu0 0.0
    %406 = vmatprep.subr.mxu0 0.0
    %407 = vmatpush1.msra.mxu0 0.0
    %408 = vmatprep.subr.mxu0 0.0
    %409 = vmatpush1.msra.mxu0 0.0
    %410 = vmatprep.subr.mxu0 0.0
    %411 = vmatpush1.msra.mxu0 0.0
    %412 = vmatprep.subr.mxu0 0.0
    %413 = vmatpush1.msra.mxu0 0.0
    %414 = vmatprep.subr.mxu0 0.0
    %415 = vmatpush1.msra.mxu0 0.0
    %416 = vmatprep.subr.mxu0 0.0
    %417 = vmatpush1.msra.mxu0 0.0
    %418 = vmatprep.subr.mxu0 0.0
    %419 = vmatpush1.msra.mxu0 0.0
    %420 = vmatprep.subr.mxu0 0.0
    %421 = vmatpush1.msra.mxu0 0.0
    %422 = vmatprep.subr.mxu0 0.0
    %423 = vmatpush1.msra.mxu0 0.0
    %424 = vmatprep.subr.mxu0 0.0
    %425 = vmatpush1.msra.mxu0 0.0
    %426 = vmatprep.subr.mxu0 0.0
    %427 = vmatpush1.msra.mxu0 0.0
    %428 = vmatprep.subr.mxu0 0.0
    %429 = vmatpush1.msra.mxu0 0.0
    %430 = vmatprep.subr.mxu0 0.0
    %431 = vmatpush1.msra.mxu0 0.0
    %432 = vmatprep.subr.mxu0 0.0
    %433 = vmatpush1.msra.mxu0 0.0
    %434 = vmatprep.subr.mxu0 0.0
    %435 = vmatpush1.msra.mxu0 0.0
    %436 = vmatprep.subr.mxu0 0.0
    %437 = vmatpush1.msra.mxu0 0.0
    %438 = vmatprep.subr.mxu0 0.0
    %439 = vmatpush1.msra.mxu0 0.0
    %440 = vmatprep.mubr.f32.mxu0 0.0
    %441 = vmatmul.mubr.f32.gmra.mrb[0].mxu0 %v353
    %v442 = vpop.f32.mrb[0].mxu0
    %v443 = vadd.f32 %v349, %v442
    %v444 = vpop.f32.mrb[0].mxu0
    %445 = vmatprep.mubr.f32.mxu0 0.0
    %446 = vmatmul.mubr.f32.gmra.mrb[0].mxu0 %v356
    %v447 = vpop.f32.mrb[0].mxu0
    %v448 = vadd.f32 %v349, %v447
    %v449 = vpop.f32.mrb[0].mxu0
    %450 = vmatprep.mubr.f32.mxu0 0.0
    %451 = vmatmul.mubr.f32.gmra.mrb[0].mxu0 %v359
    %v452 = vpop.f32.mrb[0].mxu0
    %v453 = vadd.f32 %v349, %v452
    %v454 = vpop.f32.mrb[0].mxu0
    %455 = vmatprep.mubr.f32.mxu0 0.0
    %456 = vmatmul.mubr.f32.gmra.mrb[0].mxu0 %v362
    %v457 = vpop.f32.mrb[0].mxu0
    %v458 = vadd.f32 %v349, %v457
    %v459 = vpop.f32.mrb[0].mxu0
    %460 = vmatprep.mubr.f32.mxu0 0.0
    %461 = vmatmul.mubr.f32.gmra.mrb[0].mxu0 %v365
    %v462 = vpop.f32.mrb[0].mxu0
    %v463 = vadd.f32 %v349, %v462
    %v464 = vpop.f32.mrb[0].mxu0
    %465 = vmatprep.mubr.f32.mxu0 0.0
    %466 = vmatmul.mubr.f32.gmra.mrb[0].mxu0 %v368
    %v467 = vpop.f32.mrb[0].mxu0
    %v468 = vadd.f32 %v349, %v467
    %v469 = vpop.f32.mrb[0].mxu0
    %470 = vmatprep.mubr.f32.mxu0 0.0
    %471 = vmatmul.mubr.f32.gmra.mrb[0].mxu0 %v371
    %v472 = vpop.f32.mrb[0].mxu0
    %v473 = vadd.f32 %v349, %v472
    %v474 = vpop.f32.mrb[0].mxu0
    %475 = vmatprep.mubr.f32.mxu0 0.0
    %476 = vmatmul.mubr.f32.gmra.mrb[0].mxu0 %v374
    %v477 = vpop.f32.mrb[0].mxu0
    %v478 = vadd.f32 %v349, %v477
    %v479 = vpop.f32.mrb[0].mxu0
    %480 = vdwg.mxu0
    %481 = vst [vmem:[#allocation2] sm:$0xff] %v443
    %482 = vst [vmem:[#allocation2 + $0x8] sm:$0xff] %v448
    %483 = vst [vmem:[#allocation2 + $0x10] sm:$0xff] %v453
    %484 = vst [vmem:[#allocation2 + $0x18] sm:$0xff] %v458
    %485 = vst [vmem:[#allocation2 + $0x20] sm:$0xff] %v463
    %486 = vst [vmem:[#allocation2 + $0x28] sm:$0xff] %v468
    %487 = vst [vmem:[#allocation2 + $0x30] sm:$0xff] %v473
    %488 = vst [vmem:[#allocation2 + $0x38] sm:$0xff] %v478
    %v489 = vld [vmem:[%s8] sm:$0xff]
    %v490 = vld [vmem:[%s8 + $0x8] sm:$0xff]
    %v491 = vld [vmem:[%s8 + $0x10] sm:$0xff]
    %v492 = vld [vmem:[%s8 + $0x18] sm:$0xff]
    %v493 = vld [vmem:[#allocation2] sm:$0xff]
    %v495 = vsel %vm351, 0.0, 0
    %497 = vmatprep.subr.mxu0 0.0
    %498 = vmatpush1.msra.mxu0 %v489
    %499 = vmatprep.subr.mxu0 0.0
    %500 = vmatpush1.msra.mxu0 %v490
    %501 = vmatprep.subr.mxu0 0.0
    %502 = vmatpush1.msra.mxu0 %v491
    %503 = vmatprep.subr.mxu0 0.0
    %504 = vmatpush1.msra.mxu0 %v492
    %505 = vmatprep.subr.mxu0 0.0
    %506 = vmatpush1.msra.mxu0 0.0
    %507 = vmatprep.subr.mxu0 0.0
    %508 = vmatpush1.msra.mxu0 0.0
    %509 = vmatprep.subr.mxu0 0.0
    %510 = vmatpush1.msra.mxu0 0.0
    %511 = vmatprep.subr.mxu0 0.0
    %512 = vmatpush1.msra.mxu0 0.0
    %513 = vmatprep.subr.mxu0 0.0
    %514 = vmatpush1.msra.mxu0 0.0
    %515 = vmatprep.subr.mxu0 0.0
    %516 = vmatpush1.msra.mxu0 0.0
    %517 = vmatprep.subr.mxu0 0.0
    %518 = vmatpush1.msra.mxu0 0.0
    %519 = vmatprep.subr.mxu0 0.0
    %520 = vmatpush1.msra.mxu0 0.0
    %521 = vmatprep.subr.mxu0 0.0
    %522 = vmatpush1.msra.mxu0 0.0
    %523 = vmatprep.subr.mxu0 0.0
    %524 = vmatpush1.msra.mxu0 0.0
    %525 = vmatprep.subr.mxu0 0.0
    %526 = vmatpush1.msra.mxu0 0.0
    %527 = vmatprep.subr.mxu0 0.0
    %528 = vmatpush1.msra.mxu0 0.0
    %529 = vmatprep.subr.mxu0 0.0
    %530 = vmatpush1.msra.mxu0 0.0
    %531 = vmatprep.subr.mxu0 0.0
    %532 = vmatpush1.msra.mxu0 0.0
    %533 = vmatprep.subr.mxu0 0.0
    %534 = vmatpush1.msra.mxu0 0.0
    %535 = vmatprep.subr.mxu0 0.0
    %536 = vmatpush1.msra.mxu0 0.0
    %537 = vmatprep.subr.mxu0 0.0
    %538 = vmatpush1.msra.mxu0 0.0
    %539 = vmatprep.subr.mxu0 0.0
    %540 = vmatpush1.msra.mxu0 0.0
    %541 = vmatprep.subr.mxu0 0.0
    %542 = vmatpush1.msra.mxu0 0.0
    %543 = vmatprep.subr.mxu0 0.0
    %544 = vmatpush1.msra.mxu0 0.0
    %545 = vmatprep.subr.mxu0 0.0
    %546 = vmatpush1.msra.mxu0 0.0
    %547 = vmatprep.subr.mxu0 0.0
    %548 = vmatpush1.msra.mxu0 0.0
    %549 = vmatprep.subr.mxu0 0.0
    %550 = vmatpush1.msra.mxu0 0.0
    %551 = vmatprep.subr.mxu0 0.0
    %552 = vmatpush1.msra.mxu0 0.0
    %553 = vmatprep.subr.mxu0 0.0
    %554 = vmatpush1.msra.mxu0 0.0
    %555 = vmatprep.subr.mxu0 0.0
    %556 = vmatpush1.msra.mxu0 0.0
    %557 = vmatprep.subr.mxu0 0.0
    %558 = vmatpush1.msra.mxu0 0.0
    %559 = vmatprep.subr.mxu0 0.0
    %560 = vmatpush1.msra.mxu0 0.0
    %561 = vmatprep.mubr.f32.mxu0 0.0
    %562 = vmatmul.mubr.f32.gmra.mrb[0].mxu0 %v495
    %v563 = vpop.f32.mrb[0].mxu0
    %v564 = vadd.f32 %v493, %v563
    %v565 = vpop.f32.mrb[0].mxu0
    %566 = vdwg.mxu0
    %v567 = vxor.u32 %v564, 2147483648
    %v568 = vmul.f32 %v567, 1.442695
    %v569 = vpow.pop %v568
    %v570 = vadd.f32 %v569, 1.0
    %v571 = vrcp.pop %v570
    %v572 = vmul.f32 1.0, %v571
    %v573 = vtanh.pop %v564
    %v574 = vmul.f32 %v572, 0.0
    %576 = vrot.lane.b32.xlu0 %v573, 64
    %v577 = vpop.permute.xlu0 %576
    %v579 = vmul.f32 %v572, %v577
    %581 = vrot.lane.b32.xlu0 %v579, 32
    %v582 = vpop.permute.xlu0 %581
    %v584 = vadd.f32 %v574, %v582
    %v585 = vtanh.pop %v584
    %587 = vrot.lane.b32.xlu0 %v585, 64
    %v588 = vpop.permute.xlu0 %587
    %v590 = vmul.f32 %v572, %v588
    %v591 = vld [vmem:[%s1] sm:$0xff]
    %593 = vset.pattern.permute.xlu0 0
    %594 = vperm.xlu0 %593, %v591
    %v595 = vpop.permute.xlu0 %594
    %v597 = vmul.f32 %v590, %v595
    %599 = vrot.lane.b32.xlu0 %v597, 32
    %v600 = vpop.permute.xlu0 %599
    %602 = vst.msk [vmem:[#allocation3] sm:$0xff] %vm351, %v600
    %s603 = scalar_lea.vmem [#allocation2], 8
    %v604 = vld [vmem:[%s603] sm:$0xff]
    %606 = vrot.lane.b32.xlu0 %v590, 32
    %v607 = vpop.permute.xlu0 %606
    %v608 = vsel %vm351, %v607, 0
    %610 = vmatprep.subr.mxu0 0.0
    %611 = vmatpush1.msra.mxu0 %v489
    %612 = vmatprep.subr.mxu0 0.0
    %613 = vmatpush1.msra.mxu0 %v490
    %614 = vmatprep.subr.mxu0 0.0
    %615 = vmatpush1.msra.mxu0 %v491
    %616 = vmatprep.subr.mxu0 0.0
    %617 = vmatpush1.msra.mxu0 %v492
    %618 = vmatprep.subr.mxu0 0.0
    %619 = vmatpush1.msra.mxu0 0.0
    %620 = vmatprep.subr.mxu0 0.0
    %621 = vmatpush1.msra.mxu0 0.0
    %622 = vmatprep.subr.mxu0 0.0
    %623 = vmatpush1.msra.mxu0 0.0
    %624 = vmatprep.subr.mxu0 0.0
    %625 = vmatpush1.msra.mxu0 0.0
    %626 = vmatprep.subr.mxu0 0.0
    %627 = vmatpush1.msra.mxu0 0.0
    %628 = vmatprep.subr.mxu0 0.0
    %629 = vmatpush1.msra.mxu0 0.0
    %630 = vmatprep.subr.mxu0 0.0
    %631 = vmatpush1.msra.mxu0 0.0
    %632 = vmatprep.subr.mxu0 0.0
    %633 = vmatpush1.msra.mxu0 0.0
    %634 = vmatprep.subr.mxu0 0.0
    %635 = vmatpush1.msra.mxu0 0.0
    %636 = vmatprep.subr.mxu0 0.0
    %637 = vmatpush1.msra.mxu0 0.0
    %638 = vmatprep.subr.mxu0 0.0
    %639 = vmatpush1.msra.mxu0 0.0
    %640 = vmatprep.subr.mxu0 0.0
    %641 = vmatpush1.msra.mxu0 0.0
    %642 = vmatprep.subr.mxu0 0.0
    %643 = vmatpush1.msra.mxu0 0.0
    %644 = vmatprep.subr.mxu0 0.0
    %645 = vmatpush1.msra.mxu0 0.0
    %646 = vmatprep.subr.mxu0 0.0
    %647 = vmatpush1.msra.mxu0 0.0
    %648 = vmatprep.subr.mxu0 0.0
    %649 = vmatpush1.msra.mxu0 0.0
    %650 = vmatprep.subr.mxu0 0.0
    %651 = vmatpush1.msra.mxu0 0.0
    %652 = vmatprep.subr.mxu0 0.0
    %653 = vmatpush1.msra.mxu0 0.0
    %654 = vmatprep.subr.mxu0 0.0
    %655 = vmatpush1.msra.mxu0 0.0
    %656 = vmatprep.subr.mxu0 0.0
    %657 = vmatpush1.msra.mxu0 0.0
    %658 = vmatprep.subr.mxu0 0.0
    %659 = vmatpush1.msra.mxu0 0.0
    %660 = vmatprep.subr.mxu0 0.0
    %661 = vmatpush1.msra.mxu0 0.0
    %662 = vmatprep.subr.mxu0 0.0
    %663 = vmatpush1.msra.mxu0 0.0
    %664 = vmatprep.subr.mxu0 0.0
    %665 = vmatpush1.msra.mxu0 0.0
    %666 = vmatprep.subr.mxu0 0.0
    %667 = vmatpush1.msra.mxu0 0.0
    %668 = vmatprep.subr.mxu0 0.0
    %669 = vmatpush1.msra.mxu0 0.0
    %670 = vmatprep.subr.mxu0 0.0
    %671 = vmatpush1.msra.mxu0 0.0
    %672 = vmatprep.subr.mxu0 0.0
    %673 = vmatpush1.msra.mxu0 0.0
    %674 = vmatprep.mubr.f32.mxu0 0.0
    %675 = vmatmul.mubr.f32.gmra.mrb[0].mxu0 %v608
    %v676 = vpop.f32.mrb[0].mxu0
    %v677 = vadd.f32 %v604, %v676
    %v678 = vpop.f32.mrb[0].mxu0
    %679 = vdwg.mxu0
    %v680 = vxor.u32 %v677, 2147483648
    %v681 = vmul.f32 %v680, 1.442695
    %v682 = vpow.pop %v681
    %v683 = vadd.f32 %v682, 1.0
    %v684 = vrcp.pop %v683
    %v685 = vmul.f32 1.0, %v684
    %v686 = vtanh.pop %v677
    %v687 = vmul.f32 %v685, %v584
    %689 = vrot.lane.b32.xlu0 %v686, 64
    %v690 = vpop.permute.xlu0 %689
    %v692 = vmul.f32 %v685, %v690
    %694 = vrot.lane.b32.xlu0 %v692, 32
    %v695 = vpop.permute.xlu0 %694
    %v697 = vadd.f32 %v687, %v695
    %v698 = vtanh.pop %v697
    %700 = vrot.lane.b32.xlu0 %v698, 64
    %v701 = vpop.permute.xlu0 %700
    %v703 = vmul.f32 %v685, %v701
    %s704 = scalar_lea.vmem %s1, 8
    %v705 = vld [vmem:[%s704] sm:$0xff]
    %707 = vset.pattern.permute.xlu0 0
    %708 = vperm.xlu0 %707, %v705
    %v709 = vpop.permute.xlu0 %708
    %v711 = vmul.f32 %v703, %v709
    %713 = vrot.lane.b32.xlu0 %v711, 32
    %v714 = vpop.permute.xlu0 %713
    %s716 = scalar_lea.vmem [#allocation3], 8
    %717 = vst.msk [vmem:[%s716] sm:$0xff] %vm351, %v714
    %s718 = scalar_lea.vmem [#allocation2], 16
    %v719 = vld [vmem:[%s718] sm:$0xff]
    %721 = vrot.lane.b32.xlu0 %v703, 32
    %v722 = vpop.permute.xlu0 %721
    %v723 = vsel %vm351, %v722, 0
    %725 = vmatprep.subr.mxu0 0.0
    %726 = vmatpush1.msra.mxu0 %v489
    %727 = vmatprep.subr.mxu0 0.0
    %728 = vmatpush1.msra.mxu0 %v490
    %729 = vmatprep.subr.mxu0 0.0
    %730 = vmatpush1.msra.mxu0 %v491
    %731 = vmatprep.subr.mxu0 0.0
    %732 = vmatpush1.msra.mxu0 %v492
    %733 = vmatprep.subr.mxu0 0.0
    %734 = vmatpush1.msra.mxu0 0.0
    %735 = vmatprep.subr.mxu0 0.0
    %736 = vmatpush1.msra.mxu0 0.0
    %737 = vmatprep.subr.mxu0 0.0
    %738 = vmatpush1.msra.mxu0 0.0
    %739 = vmatprep.subr.mxu0 0.0
    %740 = vmatpush1.msra.mxu0 0.0
    %741 = vmatprep.subr.mxu0 0.0
    %742 = vmatpush1.msra.mxu0 0.0
    %743 = vmatprep.subr.mxu0 0.0
    %744 = vmatpush1.msra.mxu0 0.0
    %745 = vmatprep.subr.mxu0 0.0
    %746 = vmatpush1.msra.mxu0 0.0
    %747 = vmatprep.subr.mxu0 0.0
    %748 = vmatpush1.msra.mxu0 0.0
    %749 = vmatprep.subr.mxu0 0.0
    %750 = vmatpush1.msra.mxu0 0.0
    %751 = vmatprep.subr.mxu0 0.0
    %752 = vmatpush1.msra.mxu0 0.0
    %753 = vmatprep.subr.mxu0 0.0
    %754 = vmatpush1.msra.mxu0 0.0
    %755 = vmatprep.subr.mxu0 0.0
    %756 = vmatpush1.msra.mxu0 0.0
    %757 = vmatprep.subr.mxu0 0.0
    %758 = vmatpush1.msra.mxu0 0.0
    %759 = vmatprep.subr.mxu0 0.0
    %760 = vmatpush1.msra.mxu0 0.0
    %761 = vmatprep.subr.mxu0 0.0
    %762 = vmatpush1.msra.mxu0 0.0
    %763 = vmatprep.subr.mxu0 0.0
    %764 = vmatpush1.msra.mxu0 0.0
    %765 = vmatprep.subr.mxu0 0.0
    %766 = vmatpush1.msra.mxu0 0.0
    %767 = vmatprep.subr.mxu0 0.0
    %768 = vmatpush1.msra.mxu0 0.0
    %769 = vmatprep.subr.mxu0 0.0
    %770 = vmatpush1.msra.mxu0 0.0
    %771 = vmatprep.subr.mxu0 0.0
    %772 = vmatpush1.msra.mxu0 0.0
    %773 = vmatprep.subr.mxu0 0.0
    %774 = vmatpush1.msra.mxu0 0.0
    %775 = vmatprep.subr.mxu0 0.0
    %776 = vmatpush1.msra.mxu0 0.0
    %777 = vmatprep.subr.mxu0 0.0
    %778 = vmatpush1.msra.mxu0 0.0
    %779 = vmatprep.subr.mxu0 0.0
    %780 = vmatpush1.msra.mxu0 0.0
    %781 = vmatprep.subr.mxu0 0.0
    %782 = vmatpush1.msra.mxu0 0.0
    %783 = vmatprep.subr.mxu0 0.0
    %784 = vmatpush1.msra.mxu0 0.0
    %785 = vmatprep.subr.mxu0 0.0
    %786 = vmatpush1.msra.mxu0 0.0
    %787 = vmatprep.subr.mxu0 0.0
    %788 = vmatpush1.msra.mxu0 0.0
    %789 = vmatprep.mubr.f32.mxu0 0.0
    %790 = vmatmul.mubr.f32.gmra.mrb[0].mxu0 %v723
    %v791 = vpop.f32.mrb[0].mxu0
    %v792 = vadd.f32 %v719, %v791
    %v793 = vpop.f32.mrb[0].mxu0
    %794 = vdwg.mxu0
    %v795 = vxor.u32 %v792, 2147483648
    %v796 = vmul.f32 %v795, 1.442695
    %v797 = vpow.pop %v796
    %v798 = vadd.f32 %v797, 1.0
    %v799 = vrcp.pop %v798
    %v800 = vmul.f32 1.0, %v799
    %v801 = vtanh.pop %v792
    %v802 = vmul.f32 %v800, %v697
    %804 = vrot.lane.b32.xlu0 %v801, 64
    %v805 = vpop.permute.xlu0 %804
    %v807 = vmul.f32 %v800, %v805
    %809 = vrot.lane.b32.xlu0 %v807, 32
    %v810 = vpop.permute.xlu0 %809
    %v812 = vadd.f32 %v802, %v810
    %v813 = vtanh.pop %v812
    %815 = vrot.lane.b32.xlu0 %v813, 64
    %v816 = vpop.permute.xlu0 %815
    %v818 = vmul.f32 %v800, %v816
    %s819 = scalar_lea.vmem %s1, 16
    %v820 = vld [vmem:[%s819] sm:$0xff]
    %822 = vset.pattern.permute.xlu0 0
    %823 = vperm.xlu0 %822, %v820
    %v824 = vpop.permute.xlu0 %823
    %v826 = vmul.f32 %v818, %v824
    %828 = vrot.lane.b32.xlu0 %v826, 32
    %v829 = vpop.permute.xlu0 %828
    %s831 = scalar_lea.vmem [#allocation3], 16
    %832 = vst.msk [vmem:[%s831] sm:$0xff] %vm351, %v829
    %s833 = scalar_lea.vmem [#allocation2], 24
    %v834 = vld [vmem:[%s833] sm:$0xff]
    %836 = vrot.lane.b32.xlu0 %v818, 32
    %v837 = vpop.permute.xlu0 %836
    %v838 = vsel %vm351, %v837, 0
    %840 = vmatprep.subr.mxu0 0.0
    %841 = vmatpush1.msra.mxu0 %v489
    %842 = vmatprep.subr.mxu0 0.0
    %843 = vmatpush1.msra.mxu0 %v490
    %844 = vmatprep.subr.mxu0 0.0
    %845 = vmatpush1.msra.mxu0 %v491
    %846 = vmatprep.subr.mxu0 0.0
    %847 = vmatpush1.msra.mxu0 %v492
    %848 = vmatprep.subr.mxu0 0.0
    %849 = vmatpush1.msra.mxu0 0.0
    %850 = vmatprep.subr.mxu0 0.0
    %851 = vmatpush1.msra.mxu0 0.0
    %852 = vmatprep.subr.mxu0 0.0
    %853 = vmatpush1.msra.mxu0 0.0
    %854 = vmatprep.subr.mxu0 0.0
    %855 = vmatpush1.msra.mxu0 0.0
    %856 = vmatprep.subr.mxu0 0.0
    %857 = vmatpush1.msra.mxu0 0.0
    %858 = vmatprep.subr.mxu0 0.0
    %859 = vmatpush1.msra.mxu0 0.0
    %860 = vmatprep.subr.mxu0 0.0
    %861 = vmatpush1.msra.mxu0 0.0
    %862 = vmatprep.subr.mxu0 0.0
    %863 = vmatpush1.msra.mxu0 0.0
    %864 = vmatprep.subr.mxu0 0.0
    %865 = vmatpush1.msra.mxu0 0.0
    %866 = vmatprep.subr.mxu0 0.0
    %867 = vmatpush1.msra.mxu0 0.0
    %868 = vmatprep.subr.mxu0 0.0
    %869 = vmatpush1.msra.mxu0 0.0
    %870 = vmatprep.subr.mxu0 0.0
    %871 = vmatpush1.msra.mxu0 0.0
    %872 = vmatprep.subr.mxu0 0.0
    %873 = vmatpush1.msra.mxu0 0.0
    %874 = vmatprep.subr.mxu0 0.0
    %875 = vmatpush1.msra.mxu0 0.0
    %876 = vmatprep.subr.mxu0 0.0
    %877 = vmatpush1.msra.mxu0 0.0
    %878 = vmatprep.subr.mxu0 0.0
    %879 = vmatpush1.msra.mxu0 0.0
    %880 = vmatprep.subr.mxu0 0.0
    %881 = vmatpush1.msra.mxu0 0.0
    %882 = vmatprep.subr.mxu0 0.0
    %883 = vmatpush1.msra.mxu0 0.0
    %884 = vmatprep.subr.mxu0 0.0
    %885 = vmatpush1.msra.mxu0 0.0
    %886 = vmatprep.subr.mxu0 0.0
    %887 = vmatpush1.msra.mxu0 0.0
    %888 = vmatprep.subr.mxu0 0.0
    %889 = vmatpush1.msra.mxu0 0.0
    %890 = vmatprep.subr.mxu0 0.0
    %891 = vmatpush1.msra.mxu0 0.0
    %892 = vmatprep.subr.mxu0 0.0
    %893 = vmatpush1.msra.mxu0 0.0
    %894 = vmatprep.subr.mxu0 0.0
    %895 = vmatpush1.msra.mxu0 0.0
    %896 = vmatprep.subr.mxu0 0.0
    %897 = vmatpush1.msra.mxu0 0.0
    %898 = vmatprep.subr.mxu0 0.0
    %899 = vmatpush1.msra.mxu0 0.0
    %900 = vmatprep.subr.mxu0 0.0
    %901 = vmatpush1.msra.mxu0 0.0
    %902 = vmatprep.subr.mxu0 0.0
    %903 = vmatpush1.msra.mxu0 0.0
    %904 = vmatprep.mubr.f32.mxu0 0.0
    %905 = vmatmul.mubr.f32.gmra.mrb[0].mxu0 %v838
    %v906 = vpop.f32.mrb[0].mxu0
    %v907 = vadd.f32 %v834, %v906
    %v908 = vpop.f32.mrb[0].mxu0
    %909 = vdwg.mxu0
    %v910 = vxor.u32 %v907, 2147483648
    %v911 = vmul.f32 %v910, 1.442695
    %v912 = vpow.pop %v911
    %v913 = vadd.f32 %v912, 1.0
    %v914 = vrcp.pop %v913
    %v915 = vmul.f32 1.0, %v914
    %v916 = vtanh.pop %v907
    %v917 = vmul.f32 %v915, %v812
    %919 = vrot.lane.b32.xlu0 %v916, 64
    %v920 = vpop.permute.xlu0 %919
    %v922 = vmul.f32 %v915, %v920
    %924 = vrot.lane.b32.xlu0 %v922, 32
    %v925 = vpop.permute.xlu0 %924
    %v927 = vadd.f32 %v917, %v925
    %v928 = vtanh.pop %v927
    %930 = vrot.lane.b32.xlu0 %v928, 64
    %v931 = vpop.permute.xlu0 %930
    %v933 = vmul.f32 %v915, %v931
    %s934 = scalar_lea.vmem %s1, 24
    %v935 = vld [vmem:[%s934] sm:$0xff]
    %937 = vset.pattern.permute.xlu0 0
    %938 = vperm.xlu0 %937, %v935
    %v939 = vpop.permute.xlu0 %938
    %v941 = vmul.f32 %v933, %v939
    %943 = vrot.lane.b32.xlu0 %v941, 32
    %v944 = vpop.permute.xlu0 %943
    %s946 = scalar_lea.vmem [#allocation3], 24
    %947 = vst.msk [vmem:[%s946] sm:$0xff] %vm351, %v944
    %s948 = scalar_lea.vmem [#allocation2], 32
    %v949 = vld [vmem:[%s948] sm:$0xff]
    %951 = vrot.lane.b32.xlu0 %v933, 32
    %v952 = vpop.permute.xlu0 %951
    %v953 = vsel %vm351, %v952, 0
    %955 = vmatprep.subr.mxu0 0.0
    %956 = vmatpush1.msra.mxu0 %v489
    %957 = vmatprep.subr.mxu0 0.0
    %958 = vmatpush1.msra.mxu0 %v490
    %959 = vmatprep.subr.mxu0 0.0
    %960 = vmatpush1.msra.mxu0 %v491
    %961 = vmatprep.subr.mxu0 0.0
    %962 = vmatpush1.msra.mxu0 %v492
    %963 = vmatprep.subr.mxu0 0.0
    %964 = vmatpush1.msra.mxu0 0.0
    %965 = vmatprep.subr.mxu0 0.0
    %966 = vmatpush1.msra.mxu0 0.0
    %967 = vmatprep.subr.mxu0 0.0
    %968 = vmatpush1.msra.mxu0 0.0
    %969 = vmatprep.subr.mxu0 0.0
    %970 = vmatpush1.msra.mxu0 0.0
    %971 = vmatprep.subr.mxu0 0.0
    %972 = vmatpush1.msra.mxu0 0.0
    %973 = vmatprep.subr.mxu0 0.0
    %974 = vmatpush1.msra.mxu0 0.0
    %975 = vmatprep.subr.mxu0 0.0
    %976 = vmatpush1.msra.mxu0 0.0
    %977 = vmatprep.subr.mxu0 0.0
    %978 = vmatpush1.msra.mxu0 0.0
    %979 = vmatprep.subr.mxu0 0.0
    %980 = vmatpush1.msra.mxu0 0.0
    %981 = vmatprep.subr.mxu0 0.0
    %982 = vmatpush1.msra.mxu0 0.0
    %983 = vmatprep.subr.mxu0 0.0
    %984 = vmatpush1.msra.mxu0 0.0
    %985 = vmatprep.subr.mxu0 0.0
    %986 = vmatpush1.msra.mxu0 0.0
    %987 = vmatprep.subr.mxu0 0.0
    %988 = vmatpush1.msra.mxu0 0.0
    %989 = vmatprep.subr.mxu0 0.0
    %990 = vmatpush1.msra.mxu0 0.0
    %991 = vmatprep.subr.mxu0 0.0
    %992 = vmatpush1.msra.mxu0 0.0
    %993 = vmatprep.subr.mxu0 0.0
    %994 = vmatpush1.msra.mxu0 0.0
    %995 = vmatprep.subr.mxu0 0.0
    %996 = vmatpush1.msra.mxu0 0.0
    %997 = vmatprep.subr.mxu0 0.0
    %998 = vmatpush1.msra.mxu0 0.0
    %999 = vmatprep.subr.mxu0 0.0
    %1000 = vmatpush1.msra.mxu0 0.0
    %1001 = vmatprep.subr.mxu0 0.0
    %1002 = vmatpush1.msra.mxu0 0.0
    %1003 = vmatprep.subr.mxu0 0.0
    %1004 = vmatpush1.msra.mxu0 0.0
    %1005 = vmatprep.subr.mxu0 0.0
    %1006 = vmatpush1.msra.mxu0 0.0
    %1007 = vmatprep.subr.mxu0 0.0
    %1008 = vmatpush1.msra.mxu0 0.0
    %1009 = vmatprep.subr.mxu0 0.0
    %1010 = vmatpush1.msra.mxu0 0.0
    %1011 = vmatprep.subr.mxu0 0.0
    %1012 = vmatpush1.msra.mxu0 0.0
    %1013 = vmatprep.subr.mxu0 0.0
    %1014 = vmatpush1.msra.mxu0 0.0
    %1015 = vmatprep.subr.mxu0 0.0
    %1016 = vmatpush1.msra.mxu0 0.0
    %1017 = vmatprep.subr.mxu0 0.0
    %1018 = vmatpush1.msra.mxu0 0.0
    %1019 = vmatprep.mubr.f32.mxu0 0.0
    %1020 = vmatmul.mubr.f32.gmra.mrb[0].mxu0 %v953
    %v1021 = vpop.f32.mrb[0].mxu0
    %v1022 = vadd.f32 %v949, %v1021
    %v1023 = vpop.f32.mrb[0].mxu0
    %1024 = vdwg.mxu0
    %v1025 = vxor.u32 %v1022, 2147483648
    %v1026 = vmul.f32 %v1025, 1.442695
    %v1027 = vpow.pop %v1026
    %v1028 = vadd.f32 %v1027, 1.0
    %v1029 = vrcp.pop %v1028
    %v1030 = vmul.f32 1.0, %v1029
    %v1031 = vtanh.pop %v1022
    %v1032 = vmul.f32 %v1030, %v927
    %1034 = vrot.lane.b32.xlu0 %v1031, 64
    %v1035 = vpop.permute.xlu0 %1034
    %v1037 = vmul.f32 %v1030, %v1035
    %1039 = vrot.lane.b32.xlu0 %v1037, 32
    %v1040 = vpop.permute.xlu0 %1039
    %v1042 = vadd.f32 %v1032, %v1040
    %v1043 = vtanh.pop %v1042
    %1045 = vrot.lane.b32.xlu0 %v1043, 64
    %v1046 = vpop.permute.xlu0 %1045
    %v1048 = vmul.f32 %v1030, %v1046
    %s1049 = scalar_lea.vmem %s1, 32
    %v1050 = vld [vmem:[%s1049] sm:$0xff]
    %1052 = vset.pattern.permute.xlu0 0
    %1053 = vperm.xlu0 %1052, %v1050
    %v1054 = vpop.permute.xlu0 %1053
    %v1056 = vmul.f32 %v1048, %v1054
    %1058 = vrot.lane.b32.xlu0 %v1056, 32
    %v1059 = vpop.permute.xlu0 %1058
    %s1061 = scalar_lea.vmem [#allocation3], 32
    %1062 = vst.msk [vmem:[%s1061] sm:$0xff] %vm351, %v1059
    %s1063 = scalar_lea.vmem [#allocation2], 40
    %v1064 = vld [vmem:[%s1063] sm:$0xff]
    %1066 = vrot.lane.b32.xlu0 %v1048, 32
    %v1067 = vpop.permute.xlu0 %1066
    %v1068 = vsel %vm351, %v1067, 0
    %1070 = vmatprep.subr.mxu0 0.0
    %1071 = vmatpush1.msra.mxu0 %v489
    %1072 = vmatprep.subr.mxu0 0.0
    %1073 = vmatpush1.msra.mxu0 %v490
    %1074 = vmatprep.subr.mxu0 0.0
    %1075 = vmatpush1.msra.mxu0 %v491
    %1076 = vmatprep.subr.mxu0 0.0
    %1077 = vmatpush1.msra.mxu0 %v492
    %1078 = vmatprep.subr.mxu0 0.0
    %1079 = vmatpush1.msra.mxu0 0.0
    %1080 = vmatprep.subr.mxu0 0.0
    %1081 = vmatpush1.msra.mxu0 0.0
    %1082 = vmatprep.subr.mxu0 0.0
    %1083 = vmatpush1.msra.mxu0 0.0
    %1084 = vmatprep.subr.mxu0 0.0
    %1085 = vmatpush1.msra.mxu0 0.0
    %1086 = vmatprep.subr.mxu0 0.0
    %1087 = vmatpush1.msra.mxu0 0.0
    %1088 = vmatprep.subr.mxu0 0.0
    %1089 = vmatpush1.msra.mxu0 0.0
    %1090 = vmatprep.subr.mxu0 0.0
    %1091 = vmatpush1.msra.mxu0 0.0
    %1092 = vmatprep.subr.mxu0 0.0
    %1093 = vmatpush1.msra.mxu0 0.0
    %1094 = vmatprep.subr.mxu0 0.0
    %1095 = vmatpush1.msra.mxu0 0.0
    %1096 = vmatprep.subr.mxu0 0.0
    %1097 = vmatpush1.msra.mxu0 0.0
    %1098 = vmatprep.subr.mxu0 0.0
    %1099 = vmatpush1.msra.mxu0 0.0
    %1100 = vmatprep.subr.mxu0 0.0
    %1101 = vmatpush1.msra.mxu0 0.0
    %1102 = vmatprep.subr.mxu0 0.0
    %1103 = vmatpush1.msra.mxu0 0.0
    %1104 = vmatprep.subr.mxu0 0.0
    %1105 = vmatpush1.msra.mxu0 0.0
    %1106 = vmatprep.subr.mxu0 0.0
    %1107 = vmatpush1.msra.mxu0 0.0
    %1108 = vmatprep.subr.mxu0 0.0
    %1109 = vmatpush1.msra.mxu0 0.0
    %1110 = vmatprep.subr.mxu0 0.0
    %1111 = vmatpush1.msra.mxu0 0.0
    %1112 = vmatprep.subr.mxu0 0.0
    %1113 = vmatpush1.msra.mxu0 0.0
    %1114 = vmatprep.subr.mxu0 0.0
    %1115 = vmatpush1.msra.mxu0 0.0
    %1116 = vmatprep.subr.mxu0 0.0
    %1117 = vmatpush1.msra.mxu0 0.0
    %1118 = vmatprep.subr.mxu0 0.0
    %1119 = vmatpush1.msra.mxu0 0.0
    %1120 = vmatprep.subr.mxu0 0.0
    %1121 = vmatpush1.msra.mxu0 0.0
    %1122 = vmatprep.subr.mxu0 0.0
    %1123 = vmatpush1.msra.mxu0 0.0
    %1124 = vmatprep.subr.mxu0 0.0
    %1125 = vmatpush1.msra.mxu0 0.0
    %1126 = vmatprep.subr.mxu0 0.0
    %1127 = vmatpush1.msra.mxu0 0.0
    %1128 = vmatprep.subr.mxu0 0.0
    %1129 = vmatpush1.msra.mxu0 0.0
    %1130 = vmatprep.subr.mxu0 0.0
    %1131 = vmatpush1.msra.mxu0 0.0
    %1132 = vmatprep.subr.mxu0 0.0
    %1133 = vmatpush1.msra.mxu0 0.0
    %1134 = vmatprep.mubr.f32.mxu0 0.0
    %1135 = vmatmul.mubr.f32.gmra.mrb[0].mxu0 %v1068
    %v1136 = vpop.f32.mrb[0].mxu0
    %v1137 = vadd.f32 %v1064, %v1136
    %v1138 = vpop.f32.mrb[0].mxu0
    %1139 = vdwg.mxu0
    %v1140 = vxor.u32 %v1137, 2147483648
    %v1141 = vmul.f32 %v1140, 1.442695
    %v1142 = vpow.pop %v1141
    %v1143 = vadd.f32 %v1142, 1.0
    %v1144 = vrcp.pop %v1143
    %v1145 = vmul.f32 1.0, %v1144
    %v1146 = vtanh.pop %v1137
    %v1147 = vmul.f32 %v1145, %v1042
    %1149 = vrot.lane.b32.xlu0 %v1146, 64
    %v1150 = vpop.permute.xlu0 %1149
    %v1152 = vmul.f32 %v1145, %v1150
    %1154 = vrot.lane.b32.xlu0 %v1152, 32
    %v1155 = vpop.permute.xlu0 %1154
    %v1157 = vadd.f32 %v1147, %v1155
    %v1158 = vtanh.pop %v1157
    %1160 = vrot.lane.b32.xlu0 %v1158, 64
    %v1161 = vpop.permute.xlu0 %1160
    %v1163 = vmul.f32 %v1145, %v1161
    %s1164 = scalar_lea.vmem %s1, 40
    %v1165 = vld [vmem:[%s1164] sm:$0xff]
    %1167 = vset.pattern.permute.xlu0 0
    %1168 = vperm.xlu0 %1167, %v1165
    %v1169 = vpop.permute.xlu0 %1168
    %v1171 = vmul.f32 %v1163, %v1169
    %1173 = vrot.lane.b32.xlu0 %v1171, 32
    %v1174 = vpop.permute.xlu0 %1173
    %s1176 = scalar_lea.vmem [#allocation3], 40
    %1177 = vst.msk [vmem:[%s1176] sm:$0xff] %vm351, %v1174
    %s1178 = scalar_lea.vmem [#allocation2], 48
    %v1179 = vld [vmem:[%s1178] sm:$0xff]
    %1181 = vrot.lane.b32.xlu0 %v1163, 32
    %v1182 = vpop.permute.xlu0 %1181
    %v1183 = vsel %vm351, %v1182, 0
    %1185 = vmatprep.subr.mxu0 0.0
    %1186 = vmatpush1.msra.mxu0 %v489
    %1187 = vmatprep.subr.mxu0 0.0
    %1188 = vmatpush1.msra.mxu0 %v490
    %1189 = vmatprep.subr.mxu0 0.0
    %1190 = vmatpush1.msra.mxu0 %v491
    %1191 = vmatprep.subr.mxu0 0.0
    %1192 = vmatpush1.msra.mxu0 %v492
    %1193 = vmatprep.subr.mxu0 0.0
    %1194 = vmatpush1.msra.mxu0 0.0
    %1195 = vmatprep.subr.mxu0 0.0
    %1196 = vmatpush1.msra.mxu0 0.0
    %1197 = vmatprep.subr.mxu0 0.0
    %1198 = vmatpush1.msra.mxu0 0.0
    %1199 = vmatprep.subr.mxu0 0.0
    %1200 = vmatpush1.msra.mxu0 0.0
    %1201 = vmatprep.subr.mxu0 0.0
    %1202 = vmatpush1.msra.mxu0 0.0
    %1203 = vmatprep.subr.mxu0 0.0
    %1204 = vmatpush1.msra.mxu0 0.0
    %1205 = vmatprep.subr.mxu0 0.0
    %1206 = vmatpush1.msra.mxu0 0.0
    %1207 = vmatprep.subr.mxu0 0.0
    %1208 = vmatpush1.msra.mxu0 0.0
    %1209 = vmatprep.subr.mxu0 0.0
    %1210 = vmatpush1.msra.mxu0 0.0
    %1211 = vmatprep.subr.mxu0 0.0
    %1212 = vmatpush1.msra.mxu0 0.0
    %1213 = vmatprep.subr.mxu0 0.0
    %1214 = vmatpush1.msra.mxu0 0.0
    %1215 = vmatprep.subr.mxu0 0.0
    %1216 = vmatpush1.msra.mxu0 0.0
    %1217 = vmatprep.subr.mxu0 0.0
    %1218 = vmatpush1.msra.mxu0 0.0
    %1219 = vmatprep.subr.mxu0 0.0
    %1220 = vmatpush1.msra.mxu0 0.0
    %1221 = vmatprep.subr.mxu0 0.0
    %1222 = vmatpush1.msra.mxu0 0.0
    %1223 = vmatprep.subr.mxu0 0.0
    %1224 = vmatpush1.msra.mxu0 0.0
    %1225 = vmatprep.subr.mxu0 0.0
    %1226 = vmatpush1.msra.mxu0 0.0
    %1227 = vmatprep.subr.mxu0 0.0
    %1228 = vmatpush1.msra.mxu0 0.0
    %1229 = vmatprep.subr.mxu0 0.0
    %1230 = vmatpush1.msra.mxu0 0.0
    %1231 = vmatprep.subr.mxu0 0.0
    %1232 = vmatpush1.msra.mxu0 0.0
    %1233 = vmatprep.subr.mxu0 0.0
    %1234 = vmatpush1.msra.mxu0 0.0
    %1235 = vmatprep.subr.mxu0 0.0
    %1236 = vmatpush1.msra.mxu0 0.0
    %1237 = vmatprep.subr.mxu0 0.0
    %1238 = vmatpush1.msra.mxu0 0.0
    %1239 = vmatprep.subr.mxu0 0.0
    %1240 = vmatpush1.msra.mxu0 0.0
    %1241 = vmatprep.subr.mxu0 0.0
    %1242 = vmatpush1.msra.mxu0 0.0
    %1243 = vmatprep.subr.mxu0 0.0
    %1244 = vmatpush1.msra.mxu0 0.0
    %1245 = vmatprep.subr.mxu0 0.0
    %1246 = vmatpush1.msra.mxu0 0.0
    %1247 = vmatprep.subr.mxu0 0.0
    %1248 = vmatpush1.msra.mxu0 0.0
    %1249 = vmatprep.mubr.f32.mxu0 0.0
    %1250 = vmatmul.mubr.f32.gmra.mrb[0].mxu0 %v1183
    %v1251 = vpop.f32.mrb[0].mxu0
    %v1252 = vadd.f32 %v1179, %v1251
    %v1253 = vpop.f32.mrb[0].mxu0
    %1254 = vdwg.mxu0
    %v1255 = vxor.u32 %v1252, 2147483648
    %v1256 = vmul.f32 %v1255, 1.442695
    %v1257 = vpow.pop %v1256
    %v1258 = vadd.f32 %v1257, 1.0
    %v1259 = vrcp.pop %v1258
    %v1260 = vmul.f32 1.0, %v1259
    %v1261 = vtanh.pop %v1252
    %v1262 = vmul.f32 %v1260, %v1157
    %1264 = vrot.lane.b32.xlu0 %v1261, 64
    %v1265 = vpop.permute.xlu0 %1264
    %v1267 = vmul.f32 %v1260, %v1265
    %1269 = vrot.lane.b32.xlu0 %v1267, 32
    %v1270 = vpop.permute.xlu0 %1269
    %v1272 = vadd.f32 %v1262, %v1270
    %v1273 = vtanh.pop %v1272
    %1275 = vrot.lane.b32.xlu0 %v1273, 64
    %v1276 = vpop.permute.xlu0 %1275
    %v1278 = vmul.f32 %v1260, %v1276
    %s1279 = scalar_lea.vmem %s1, 48
    %v1280 = vld [vmem:[%s1279] sm:$0xff]
    %1282 = vset.pattern.permute.xlu0 0
    %1283 = vperm.xlu0 %1282, %v1280
    %v1284 = vpop.permute.xlu0 %1283
    %v1286 = vmul.f32 %v1278, %v1284
    %1288 = vrot.lane.b32.xlu0 %v1286, 32
    %v1289 = vpop.permute.xlu0 %1288
    %s1291 = scalar_lea.vmem [#allocation3], 48
    %1292 = vst.msk [vmem:[%s1291] sm:$0xff] %vm351, %v1289
    %s1293 = scalar_lea.vmem [#allocation2], 56
    %v1294 = vld [vmem:[%s1293] sm:$0xff]
    %1296 = vrot.lane.b32.xlu0 %v1278, 32
    %v1297 = vpop.permute.xlu0 %1296
    %v1298 = vsel %vm351, %v1297, 0
    %1300 = vmatprep.subr.mxu0 0.0
    %1301 = vmatpush1.msra.mxu0 %v489
    %1302 = vmatprep.subr.mxu0 0.0
    %1303 = vmatpush1.msra.mxu0 %v490
    %1304 = vmatprep.subr.mxu0 0.0
    %1305 = vmatpush1.msra.mxu0 %v491
    %1306 = vmatprep.subr.mxu0 0.0
    %1307 = vmatpush1.msra.mxu0 %v492
    %1308 = vmatprep.subr.mxu0 0.0
    %1309 = vmatpush1.msra.mxu0 0.0
    %1310 = vmatprep.subr.mxu0 0.0
    %1311 = vmatpush1.msra.mxu0 0.0
    %1312 = vmatprep.subr.mxu0 0.0
    %1313 = vmatpush1.msra.mxu0 0.0
    %1314 = vmatprep.subr.mxu0 0.0
    %1315 = vmatpush1.msra.mxu0 0.0
    %1316 = vmatprep.subr.mxu0 0.0
    %1317 = vmatpush1.msra.mxu0 0.0
    %1318 = vmatprep.subr.mxu0 0.0
    %1319 = vmatpush1.msra.mxu0 0.0
    %1320 = vmatprep.subr.mxu0 0.0
    %1321 = vmatpush1.msra.mxu0 0.0
    %1322 = vmatprep.subr.mxu0 0.0
    %1323 = vmatpush1.msra.mxu0 0.0
    %1324 = vmatprep.subr.mxu0 0.0
    %1325 = vmatpush1.msra.mxu0 0.0
    %1326 = vmatprep.subr.mxu0 0.0
    %1327 = vmatpush1.msra.mxu0 0.0
    %1328 = vmatprep.subr.mxu0 0.0
    %1329 = vmatpush1.msra.mxu0 0.0
    %1330 = vmatprep.subr.mxu0 0.0
    %1331 = vmatpush1.msra.mxu0 0.0
    %1332 = vmatprep.subr.mxu0 0.0
    %1333 = vmatpush1.msra.mxu0 0.0
    %1334 = vmatprep.subr.mxu0 0.0
    %1335 = vmatpush1.msra.mxu0 0.0
    %1336 = vmatprep.subr.mxu0 0.0
    %1337 = vmatpush1.msra.mxu0 0.0
    %1338 = vmatprep.subr.mxu0 0.0
    %1339 = vmatpush1.msra.mxu0 0.0
    %1340 = vmatprep.subr.mxu0 0.0
    %1341 = vmatpush1.msra.mxu0 0.0
    %1342 = vmatprep.subr.mxu0 0.0
    %1343 = vmatpush1.msra.mxu0 0.0
    %1344 = vmatprep.subr.mxu0 0.0
    %1345 = vmatpush1.msra.mxu0 0.0
    %1346 = vmatprep.subr.mxu0 0.0
    %1347 = vmatpush1.msra.mxu0 0.0
    %1348 = vmatprep.subr.mxu0 0.0
    %1349 = vmatpush1.msra.mxu0 0.0
    %1350 = vmatprep.subr.mxu0 0.0
    %1351 = vmatpush1.msra.mxu0 0.0
    %1352 = vmatprep.subr.mxu0 0.0
    %1353 = vmatpush1.msra.mxu0 0.0
    %1354 = vmatprep.subr.mxu0 0.0
    %1355 = vmatpush1.msra.mxu0 0.0
    %1356 = vmatprep.subr.mxu0 0.0
    %1357 = vmatpush1.msra.mxu0 0.0
    %1358 = vmatprep.subr.mxu0 0.0
    %1359 = vmatpush1.msra.mxu0 0.0
    %1360 = vmatprep.subr.mxu0 0.0
    %1361 = vmatpush1.msra.mxu0 0.0
    %1362 = vmatprep.subr.mxu0 0.0
    %1363 = vmatpush1.msra.mxu0 0.0
    %1364 = vmatprep.mubr.f32.mxu0 0.0
    %1365 = vmatmul.mubr.f32.gmra.mrb[0].mxu0 %v1298
    %v1366 = vpop.f32.mrb[0].mxu0
    %v1367 = vadd.f32 %v1294, %v1366
    %v1368 = vpop.f32.mrb[0].mxu0
    %1369 = vdwg.mxu0
    %v1370 = vxor.u32 %v1367, 2147483648
    %v1371 = vmul.f32 %v1370, 1.442695
    %v1372 = vpow.pop %v1371
    %v1373 = vadd.f32 %v1372, 1.0
    %v1374 = vrcp.pop %v1373
    %v1375 = vmul.f32 1.0, %v1374
    %v1376 = vtanh.pop %v1367
    %v1377 = vmul.f32 %v1375, %v1272
    %1379 = vrot.lane.b32.xlu0 %v1376, 64
    %v1380 = vpop.permute.xlu0 %1379
    %v1382 = vmul.f32 %v1375, %v1380
    %1384 = vrot.lane.b32.xlu0 %v1382, 32
    %v1385 = vpop.permute.xlu0 %1384
    %v1387 = vadd.f32 %v1377, %v1385
    %v1388 = vtanh.pop %v1387
    %1390 = vrot.lane.b32.xlu0 %v1388, 64
    %v1391 = vpop.permute.xlu0 %1390
    %v1393 = vmul.f32 %v1375, %v1391
    %s1394 = scalar_lea.vmem %s1, 56
    %v1395 = vld [vmem:[%s1394] sm:$0xff]
    %1397 = vset.pattern.permute.xlu0 0
    %1398 = vperm.xlu0 %1397, %v1395
    %v1399 = vpop.permute.xlu0 %1398
    %v1401 = vmul.f32 %v1393, %v1399
    %1403 = vrot.lane.b32.xlu0 %v1401, 32
    %v1404 = vpop.permute.xlu0 %1403
    %s1406 = scalar_lea.vmem [#allocation3], 56
    %1407 = vst.msk [vmem:[%s1406] sm:$0xff] %vm351, %v1404
    // Predicated region
    $region38: #{tpu_custom_call.1} parent=1 // pred_check
      _
    $region39: #{tpu_custom_call.1} parent=1 // pred_check_branch
      %1409 = sbr.rel (0) target = $region41
    $region40: #{tpu_custom_call.1} parent=1 // pred_region
      %s1411 = ssub.s32 1024, 1024
      %1412 = vsyncadd [#allocation4], %s1411
      %s1413 = sshll.u32 [#allocation3], 4
      %s1414 = int_to_ptr.vmem [resolvable:$true] %s1413
      %1419 = dma.vmem_to_hbm [thread:$0]  %s1414, 1024, %s9, [#allocation4], 128, 128, 8
    $region41: #{tpu_custom_call.1} parent=1 // pred_fallthru
      _
    // Predicated region
    $region42: #{tpu_custom_call.1} parent=1 // pred_check
      _
    $region43: #{tpu_custom_call.1} parent=1 // pred_check_branch
      %1421 = sbr.rel (0) target = $region45
    $region44: #{tpu_custom_call.1} parent=1 // pred_region
      %1422 = dma.done [#allocation4], 1024
    $region45: #{tpu_custom_call.1} parent=1 // pred_fallthru
      _
    %1423 = vsyncpa [#allocation4], 1

</llo_original>
